<compile_context>
chip_gen: v5e
topology: v5e:2x2
jax: 0.10.0
libtpu: 0.0.40
codegen_flags: <defaults>
</compile_context>

<pallas_src>
import functools

import jax
import jax.numpy as jnp
from jax.experimental import pallas as pl
from jax.experimental.pallas import tpu as pltpu

LN_EPS = 1e-5
LANE = 128   # last-dim tile (MXU / vreg lanes)


def _round_up(n, m):
    return ((n + m - 1) // m) * m


def _sublane_multiple(dtype):
    # Second-to-last-dim packing: f32 -> 8, bf16 -> 16, int8/fp8 -> 32.
    return max(8, 32 // jnp.dtype(dtype).itemsize)


def _layernorm(h, gamma, beta, d_actual):
    """torch.nn.LayerNorm semantics (biased variance, eps inside sqrt, affine)
    on a lane-padded row, single pass in f32.  Padded columns of h are exactly
    zero (zero-padded W columns / bias), so the row sums over the padded width
    equal the true-feature sums; padded gamma/beta are zero, so padded output
    columns stay exactly zero."""
    inv_d = jnp.float32(1.0 / d_actual)
    mean = jnp.sum(h, axis=-1, keepdims=True) * inv_d
    m2 = jnp.sum(h * h, axis=-1, keepdims=True) * inv_d
    var = jnp.maximum(m2 - mean * mean, 0.0)      # guard tiny cancellation
    inv = jax.lax.rsqrt(var + LN_EPS)             # EUP slot, off the VALU path
    return (h - mean) * inv * gamma + beta


def _projection_kernel(
    x_ref,
    w1_ref, b1_ref, g1_ref, be1_ref,
    w2_ref, b2_ref, g2_ref, be2_ref,
    w3_ref, b3_ref, g3_ref, be3_ref,
    o_ref,
    *, d1, d2, d3,
):
    cdt = w1_ref.dtype          # MXU operand dtype (bf16 on the fast path)
    x = x_ref[...]

    # Layer 1: Linear -> LayerNorm -> ReLU
    h = jnp.dot(x, w1_ref[...], preferred_element_type=jnp.float32) + b1_ref[...]
    h = jnp.maximum(_layernorm(h, g1_ref[...], be1_ref[...], d1), 0.0)

    # Layer 2: Linear -> LayerNorm -> ReLU
    h = jnp.dot(h.astype(cdt), w2_ref[...],
                preferred_element_type=jnp.float32) + b2_ref[...]
    h = jnp.maximum(_layernorm(h, g2_ref[...], be2_ref[...], d2), 0.0)

    # Layer 3: Linear -> LayerNorm
    h = jnp.dot(h.astype(cdt), w3_ref[...],
                preferred_element_type=jnp.float32) + b3_ref[...]
    h = _layernorm(h, g3_ref[...], be3_ref[...], d3)

    o_ref[...] = h.astype(o_ref.dtype)


def _resident_spec(shape, single_buffer):
    # Full-extent block + constant index_map: DMA'd once, stays resident in
    # VMEM across the whole batch grid.  Single-buffered when supported so the
    # pipeline does not allocate a second (never-used) copy of every weight.
    if single_buffer:
        return pl.BlockSpec(shape, lambda i: (0, 0), pipeline_mode=pl.Buffered(1))
    return pl.BlockSpec(shape, lambda i: (0, 0))


@functools.partial(
    jax.jit,
    static_argnames=("tb", "d1", "d2", "d3", "out_dtype", "single_buffer",
                     "vmem_limit"),
)
def _projection_impl(xp, w1, b1, g1, be1, w2, b2, g2, be2, w3, b3, g3, be3,
                     *, tb, d1, d2, d3, out_dtype, single_buffer, vmem_limit):
    Bp, Hp = xp.shape
    D1p, D2p, D3p = w1.shape[1], w2.shape[1], w3.shape[1]
    params = (w1, b1, g1, be1, w2, b2, g2, be2, w3, b3, g3, be3)

    in_specs = [pl.BlockSpec((tb, Hp), lambda i: (i, 0))]
    in_specs += [_resident_spec(p.shape, single_buffer) for p in params]
    out_spec = pl.BlockSpec((tb, D3p), lambda i: (i, 0))

    cdt_size = jnp.dtype(w1.dtype).itemsize
    out_size = jnp.dtype(out_dtype).itemsize
    cost = pl.CostEstimate(
        flops=2 * Bp * (Hp * D1p + D1p * D2p + D2p * D3p),
        transcendentals=3 * Bp,                      # one rsqrt per row per LN
        bytes_accessed=int(
            Bp * Hp * cdt_size + Bp * D3p * out_size
            + cdt_size * (Hp * D1p + D1p * D2p + D2p * D3p)
            + 4 * 3 * (D1p + D2p + D3p)),            # biases + gamma + beta
    )

    kernel = functools.partial(_projection_kernel, d1=d1, d2=d2, d3=d3)
    return pl.pallas_call(
        kernel,
        out_shape=jax.ShapeDtypeStruct((Bp, D3p), out_dtype),
        grid=(Bp // tb,),
        in_specs=in_specs,
        out_specs=out_spec,
        compiler_params=pltpu.CompilerParams(
            dimension_semantics=("parallel",),       # megacore-shard batch grid
            vmem_limit_bytes=vmem_limit,
        ),
        cost_estimate=cost,
    )(xp, *params)


_SINGLE_BUFFER_OK = None   # lazily resolved: does pl.Buffered(1) lower cleanly?


def projection_network(x, params, *, block_b=512, compute_dtype=jnp.bfloat16):
    """Fused ProjectionNetwork forward.  MXU operands in `compute_dtype`
    (bf16 by default); f32 accumulation and f32 LayerNorm math; output keeps
    the input dtype."""
    global _SINGLE_BUFFER_OK

    B, H = x.shape
    D1 = params["w1"].shape[1]
    D2 = params["w2"].shape[1]
    D3 = params["w3"].shape[1]

    # Lane-align feature dims; dtype-aware sublane alignment for the batch tile.
    Hp, D1p, D2p, D3p = (_round_up(d, LANE) for d in (H, D1, D2, D3))
    sub = max(_sublane_multiple(compute_dtype), _sublane_multiple(x.dtype))

    tb = _round_up(max(sub, min(block_b, _round_up(B, sub))), sub)
    # Avoid pathological batch padding (> ~12.5% dead rows): shrink the tile.
    while True:
        Bp = _round_up(B, tb)
        if tb <= sub or (Bp - B) * 8 <= Bp:
            break
        new_tb = _round_up(max(tb // 2, sub), sub)
        if new_tb == tb:
            break
        tb = new_tb
    Bp = _round_up(B, tb)

    def pad2(a, rows, cols, dtype):
        a = a.astype(dtype)
        return jnp.pad(a, ((0, rows - a.shape[0]), (0, cols - a.shape[1])))

    f32 = jnp.float32
    xp = pad2(x, Bp, Hp, compute_dtype)
    w1 = pad2(params["w1"], Hp, D1p, compute_dtype)
    w2 = pad2(params["w2"], D1p, D2p, compute_dtype)
    w3 = pad2(params["w3"], D2p, D3p, compute_dtype)
    b1 = pad2(params["b1"], 1, D1p, f32); g1 = pad2(params["g1"], 1, D1p, f32)
    be1 = pad2(params["be1"], 1, D1p, f32)
    b2 = pad2(params["b2"], 1, D2p, f32); g2 = pad2(params["g2"], 1, D2p, f32)
    be2 = pad2(params["be2"], 1, D2p, f32)
    b3 = pad2(params["b3"], 1, D3p, f32); g3 = pad2(params["g3"], 1, D3p, f32)
    be3 = pad2(params["be3"], 1, D3p, f32)

    args = (xp, w1, b1, g1, be1, w2, b2, g2, be2, w3, b3, g3, be3)

    # Explicit scoped-VMEM budget: resident params (2x upper bound in case the
    # single-buffer probe falls back), double-buffered x/out tiles, f32
    # intermediates, plus compiler headroom.  Never below the 32 MiB default.
    cdt_size = jnp.dtype(compute_dtype).itemsize
    out_size = jnp.dtype(x.dtype).itemsize
    param_bytes = cdt_size * (Hp * D1p + D1p * D2p + D2p * D3p) \
        + 4 * 3 * (D1p + D2p + D3p)
    tile_bytes = 2 * tb * Hp * cdt_size + 2 * tb * D3p * out_size
    scratch_bytes = 6 * tb * max(Hp, D1p, D2p, D3p) * 4
    vmem_limit = int(min(max(2 * param_bytes + tile_bytes + scratch_bytes
                             + (4 << 20), 32 << 20), 112 << 20))
    # TODO(synk): on v7x (64 MiB VMEM/TC) fall back to streaming w2 over an
    # extra "arbitrary" K-tiled grid axis when resident params exceed ~48 MiB.

    run = functools.partial(
        _projection_impl, *args,
        tb=tb, d1=D1, d2=D2, d3=D3, out_dtype=jnp.dtype(x.dtype),
        vmem_limit=vmem_limit)

    if _SINGLE_BUFFER_OK is None:
        if not hasattr(pl, "Buffered"):
            _SINGLE_BUFFER_OK = False
        else:
            try:
                out = run(single_buffer=True)
                _SINGLE_BUFFER_OK = True
                return out[:B, :D3]
            except Exception:
                _SINGLE_BUFFER_OK = False
    out = run(single_buffer=_SINGLE_BUFFER_OK)
    return out[:B, :D3]


def init_params(key, hidden_size, proj_hidden_size, proj_output_size):
    """Deterministic synthetic init (PyTorch-style uniform for Linear;
    random-ish affine for LayerNorm so the kernel path is exercised)."""
    ks = jax.random.split(key, 12)

    def linear(kw, kb, fan_in, fan_out):
        bound = 1.0 / jnp.sqrt(fan_in)
        # stored as [in, out] (transpose of torch's [out, in])
        w = jax.random.uniform(kw, (fan_in, fan_out), jnp.float32, -bound, bound)
        b = jax.random.uniform(kb, (1, fan_out), jnp.float32, -bound, bound)
        return w, b

    def ln(kg, kb, d):
        g = 1.0 + 0.1 * jax.random.normal(kg, (1, d), jnp.float32)
        b = 0.1 * jax.random.normal(kb, (1, d), jnp.float32)
        return g, b

    w1, b1 = linear(ks[0], ks[1], hidden_size, proj_hidden_size)
    w2, b2 = linear(ks[2], ks[3], proj_hidden_size, proj_hidden_size)
    w3, b3 = linear(ks[4], ks[5], proj_hidden_size, proj_output_size)
    g1, be1 = ln(ks[6], ks[7], proj_hidden_size)
    g2, be2 = ln(ks[8], ks[9], proj_hidden_size)
    g3, be3 = ln(ks[10], ks[11], proj_output_size)

    return dict(w1=w1, b1=b1, g1=g1, be1=be1,
                w2=w2, b2=b2, g2=g2, be2=be2,
                w3=w3, b3=b3, g3=g3, be3=be3)


def reference(x, p):
    def ln(h, g, b):
        m = jnp.mean(h, -1, keepdims=True)
        v = jnp.mean((h - m) ** 2, -1, keepdims=True)
        return (h - m) / jnp.sqrt(v + LN_EPS) * g + b

    h = jnp.maximum(ln(x @ p["w1"] + p["b1"], p["g1"], p["be1"]), 0.0)
    h = jnp.maximum(ln(h @ p["w2"] + p["b2"], p["g2"], p["be2"]), 0.0)
    return ln(h @ p["w3"] + p["b3"], p["g3"], p["be3"])


if __name__ == "__main__":
    hidden_size, proj_hidden_size, proj_output_size = 32, 64, 32
    batch = 8

    key = jax.random.PRNGKey(0)
    kx, kp = jax.random.split(key)
    x = jax.random.normal(kx, (batch, hidden_size), jnp.float32)
    params = init_params(kp, hidden_size, proj_hidden_size, proj_output_size)

    ref = reference(x, params)

    # Exactness check: f32 MXU operands must match the f32 reference tightly.
    out_f32 = jax.block_until_ready(
        projection_network(x, params, compute_dtype=jnp.float32))
    assert out_f32.shape == (batch, proj_output_size)
    assert jnp.allclose(out_f32, ref, atol=1e-4, rtol=1e-4), "f32 path mismatch"

    # Default fast path: bf16 MXU operands, f32 accumulation + f32 LayerNorm.
    out_bf16 = jax.block_until_ready(projection_network(x, params))
    assert out_bf16.shape == (batch, proj_output_size)
    assert jnp.allclose(out_bf16, ref, atol=1e-1, rtol=1e-1), "bf16 path mismatch"

    print("KERNEL_OK")
</pallas_src>

<mosaic_0001>
module attributes {stable_mosaic.version = 11 : i64} {
  func.func @_projection_kernel(%arg0: i32, %arg1: memref<8x128xf32, #tpu.memory_space<vmem>>, %arg2: memref<128x128xf32, #tpu.memory_space<vmem>>, %arg3: memref<1x128xf32, #tpu.memory_space<vmem>>, %arg4: memref<1x128xf32, #tpu.memory_space<vmem>>, %arg5: memref<1x128xf32, #tpu.memory_space<vmem>>, %arg6: memref<128x128xf32, #tpu.memory_space<vmem>>, %arg7: memref<1x128xf32, #tpu.memory_space<vmem>>, %arg8: memref<1x128xf32, #tpu.memory_space<vmem>>, %arg9: memref<1x128xf32, #tpu.memory_space<vmem>>, %arg10: memref<128x128xf32, #tpu.memory_space<vmem>>, %arg11: memref<1x128xf32, #tpu.memory_space<vmem>>, %arg12: memref<1x128xf32, #tpu.memory_space<vmem>>, %arg13: memref<1x128xf32, #tpu.memory_space<vmem>>, %arg14: memref<8x128xf32, #tpu.memory_space<vmem>>) attributes {dimension_semantics = [#tpu.dimension_semantics<parallel>], iteration_bounds = array<i64: 1>, scalar_prefetch = 0 : i64, scratch_operands = 0 : i64, tpu.core_type = #tpu.core_type<tc>, window_params = [{transform_indices = @transform_0, window_bounds = array<i64: 8, 128>}, {pipeline_mode = #tpu.pipeline_mode<synchronous>, transform_indices = @transform_1, window_bounds = array<i64: 128, 128>}, {pipeline_mode = #tpu.pipeline_mode<synchronous>, transform_indices = @transform_2, window_bounds = array<i64: 1, 128>}, {pipeline_mode = #tpu.pipeline_mode<synchronous>, transform_indices = @transform_3, window_bounds = array<i64: 1, 128>}, {pipeline_mode = #tpu.pipeline_mode<synchronous>, transform_indices = @transform_4, window_bounds = array<i64: 1, 128>}, {pipeline_mode = #tpu.pipeline_mode<synchronous>, transform_indices = @transform_5, window_bounds = array<i64: 128, 128>}, {pipeline_mode = #tpu.pipeline_mode<synchronous>, transform_indices = @transform_6, window_bounds = array<i64: 1, 128>}, {pipeline_mode = #tpu.pipeline_mode<synchronous>, transform_indices = @transform_7, window_bounds = array<i64: 1, 128>}, {pipeline_mode = #tpu.pipeline_mode<synchronous>, transform_indices = @transform_8, window_bounds = array<i64: 1, 128>}, {pipeline_mode = #tpu.pipeline_mode<synchronous>, transform_indices = @transform_9, window_bounds = array<i64: 128, 128>}, {pipeline_mode = #tpu.pipeline_mode<synchronous>, transform_indices = @transform_10, window_bounds = array<i64: 1, 128>}, {pipeline_mode = #tpu.pipeline_mode<synchronous>, transform_indices = @transform_11, window_bounds = array<i64: 1, 128>}, {pipeline_mode = #tpu.pipeline_mode<synchronous>, transform_indices = @transform_12, window_bounds = array<i64: 1, 128>}, {transform_indices = @transform_13, window_bounds = array<i64: 8, 128>}]} {
    %c0 = arith.constant 0 : index
    %c0_0 = arith.constant 0 : index
    %0 = vector.load %arg1[%c0, %c0_0] : memref<8x128xf32, #tpu.memory_space<vmem>>, vector<8x128xf32>
    %c0_1 = arith.constant 0 : index
    %c0_2 = arith.constant 0 : index
    %1 = vector.load %arg2[%c0_1, %c0_2] : memref<128x128xf32, #tpu.memory_space<vmem>>, vector<128x128xf32>
    %cst = arith.constant dense<0.000000e+00> : vector<8x128xf32>
    %2 = tpu.matmul %0, %1, %cst {dimension_numbers = #tpu.dot_dimension_numbers<[1], [0], [0], [1], [0, 0, 1, 1], [], []>} : vector<8x128xf32>, vector<128x128xf32>, vector<8x128xf32> -> vector<8x128xf32>
    %c0_3 = arith.constant 0 : index
    %c0_4 = arith.constant 0 : index
    %3 = vector.load %arg3[%c0_3, %c0_4] : memref<1x128xf32, #tpu.memory_space<vmem>>, vector<1x128xf32>
    %4 = vector.broadcast %3 : vector<1x128xf32> to vector<8x128xf32>
    %5 = arith.addf %2, %4 : vector<8x128xf32>
    %c0_5 = arith.constant 0 : index
    %c0_6 = arith.constant 0 : index
    %6 = vector.load %arg4[%c0_5, %c0_6] : memref<1x128xf32, #tpu.memory_space<vmem>>, vector<1x128xf32>
    %c0_7 = arith.constant 0 : index
    %c0_8 = arith.constant 0 : index
    %7 = vector.load %arg5[%c0_7, %c0_8] : memref<1x128xf32, #tpu.memory_space<vmem>>, vector<1x128xf32>
    %cst_9 = arith.constant dense<0.000000e+00> : vector<8xf32>
    %8 = vector.multi_reduction <add>, %5, %cst_9 [1] : vector<8x128xf32> to vector<8xf32>
    %9 = vector.shape_cast %8 : vector<8xf32> to vector<8x1xf32>
    %cst_10 = arith.constant 1.562500e-02 : f32
    %10 = vector.broadcast %cst_10 : f32 to vector<8x1xf32>
    %11 = arith.mulf %9, %10 : vector<8x1xf32>
    %12 = arith.mulf %5, %5 : vector<8x128xf32>
    %cst_11 = arith.constant dense<0.000000e+00> : vector<8xf32>
    %13 = vector.multi_reduction <add>, %12, %cst_11 [1] : vector<8x128xf32> to vector<8xf32>
    %14 = vector.shape_cast %13 : vector<8xf32> to vector<8x1xf32>
    %cst_12 = arith.constant 1.562500e-02 : f32
    %15 = vector.broadcast %cst_12 : f32 to vector<8x1xf32>
    %16 = arith.mulf %14, %15 : vector<8x1xf32>
    %17 = arith.mulf %11, %11 : vector<8x1xf32>
    %18 = arith.subf %16, %17 : vector<8x1xf32>
    %cst_13 = arith.constant 0.000000e+00 : f32
    %19 = vector.broadcast %cst_13 : f32 to vector<8x1xf32>
    %20 = arith.maximumf %18, %19 : vector<8x1xf32>
    %cst_14 = arith.constant 9.99999974E-6 : f32
    %21 = vector.broadcast %cst_14 : f32 to vector<8x1xf32>
    %22 = arith.addf %20, %21 : vector<8x1xf32>
    %23 = math.rsqrt %22 : vector<8x1xf32>
    %24 = vector.broadcast %11 : vector<8x1xf32> to vector<8x128xf32>
    %25 = arith.subf %5, %24 : vector<8x128xf32>
    %26 = vector.broadcast %23 : vector<8x1xf32> to vector<8x128xf32>
    %27 = arith.mulf %25, %26 : vector<8x128xf32>
    %28 = vector.broadcast %6 : vector<1x128xf32> to vector<8x128xf32>
    %29 = arith.mulf %27, %28 : vector<8x128xf32>
    %30 = vector.broadcast %7 : vector<1x128xf32> to vector<8x128xf32>
    %31 = arith.addf %29, %30 : vector<8x128xf32>
    %cst_15 = arith.constant 0.000000e+00 : f32
    %32 = vector.broadcast %cst_15 : f32 to vector<8x128xf32>
    %33 = arith.maximumf %31, %32 : vector<8x128xf32>
    %c0_16 = arith.constant 0 : index
    %c0_17 = arith.constant 0 : index
    %34 = vector.load %arg6[%c0_16, %c0_17] : memref<128x128xf32, #tpu.memory_space<vmem>>, vector<128x128xf32>
    %cst_18 = arith.constant dense<0.000000e+00> : vector<8x128xf32>
    %35 = tpu.matmul %33, %34, %cst_18 {dimension_numbers = #tpu.dot_dimension_numbers<[1], [0], [0], [1], [0, 0, 1, 1], [], []>} : vector<8x128xf32>, vector<128x128xf32>, vector<8x128xf32> -> vector<8x128xf32>
    %c0_19 = arith.constant 0 : index
    %c0_20 = arith.constant 0 : index
    %36 = vector.load %arg7[%c0_19, %c0_20] : memref<1x128xf32, #tpu.memory_space<vmem>>, vector<1x128xf32>
    %37 = vector.broadcast %36 : vector<1x128xf32> to vector<8x128xf32>
    %38 = arith.addf %35, %37 : vector<8x128xf32>
    %c0_21 = arith.constant 0 : index
    %c0_22 = arith.constant 0 : index
    %39 = vector.load %arg8[%c0_21, %c0_22] : memref<1x128xf32, #tpu.memory_space<vmem>>, vector<1x128xf32>
    %c0_23 = arith.constant 0 : index
    %c0_24 = arith.constant 0 : index
    %40 = vector.load %arg9[%c0_23, %c0_24] : memref<1x128xf32, #tpu.memory_space<vmem>>, vector<1x128xf32>
    %cst_25 = arith.constant dense<0.000000e+00> : vector<8xf32>
    %41 = vector.multi_reduction <add>, %38, %cst_25 [1] : vector<8x128xf32> to vector<8xf32>
    %42 = vector.shape_cast %41 : vector<8xf32> to vector<8x1xf32>
    %cst_26 = arith.constant 1.562500e-02 : f32
    %43 = vector.broadcast %cst_26 : f32 to vector<8x1xf32>
    %44 = arith.mulf %42, %43 : vector<8x1xf32>
    %45 = arith.mulf %38, %38 : vector<8x128xf32>
    %cst_27 = arith.constant dense<0.000000e+00> : vector<8xf32>
    %46 = vector.multi_reduction <add>, %45, %cst_27 [1] : vector<8x128xf32> to vector<8xf32>
    %47 = vector.shape_cast %46 : vector<8xf32> to vector<8x1xf32>
    %cst_28 = arith.constant 1.562500e-02 : f32
    %48 = vector.broadcast %cst_28 : f32 to vector<8x1xf32>
    %49 = arith.mulf %47, %48 : vector<8x1xf32>
    %50 = arith.mulf %44, %44 : vector<8x1xf32>
    %51 = arith.subf %49, %50 : vector<8x1xf32>
    %cst_29 = arith.constant 0.000000e+00 : f32
    %52 = vector.broadcast %cst_29 : f32 to vector<8x1xf32>
    %53 = arith.maximumf %51, %52 : vector<8x1xf32>
    %cst_30 = arith.constant 9.99999974E-6 : f32
    %54 = vector.broadcast %cst_30 : f32 to vector<8x1xf32>
    %55 = arith.addf %53, %54 : vector<8x1xf32>
    %56 = math.rsqrt %55 : vector<8x1xf32>
    %57 = vector.broadcast %44 : vector<8x1xf32> to vector<8x128xf32>
    %58 = arith.subf %38, %57 : vector<8x128xf32>
    %59 = vector.broadcast %56 : vector<8x1xf32> to vector<8x128xf32>
    %60 = arith.mulf %58, %59 : vector<8x128xf32>
    %61 = vector.broadcast %39 : vector<1x128xf32> to vector<8x128xf32>
    %62 = arith.mulf %60, %61 : vector<8x128xf32>
    %63 = vector.broadcast %40 : vector<1x128xf32> to vector<8x128xf32>
    %64 = arith.addf %62, %63 : vector<8x128xf32>
    %cst_31 = arith.constant 0.000000e+00 : f32
    %65 = vector.broadcast %cst_31 : f32 to vector<8x128xf32>
    %66 = arith.maximumf %64, %65 : vector<8x128xf32>
    %c0_32 = arith.constant 0 : index
    %c0_33 = arith.constant 0 : index
    %67 = vector.load %arg10[%c0_32, %c0_33] : memref<128x128xf32, #tpu.memory_space<vmem>>, vector<128x128xf32>
    %cst_34 = arith.constant dense<0.000000e+00> : vector<8x128xf32>
    %68 = tpu.matmul %66, %67, %cst_34 {dimension_numbers = #tpu.dot_dimension_numbers<[1], [0], [0], [1], [0, 0, 1, 1], [], []>} : vector<8x128xf32>, vector<128x128xf32>, vector<8x128xf32> -> vector<8x128xf32>
    %c0_35 = arith.constant 0 : index
    %c0_36 = arith.constant 0 : index
    %69 = vector.load %arg11[%c0_35, %c0_36] : memref<1x128xf32, #tpu.memory_space<vmem>>, vector<1x128xf32>
    %70 = vector.broadcast %69 : vector<1x128xf32> to vector<8x128xf32>
    %71 = arith.addf %68, %70 : vector<8x128xf32>
    %c0_37 = arith.constant 0 : index
    %c0_38 = arith.constant 0 : index
    %72 = vector.load %arg12[%c0_37, %c0_38] : memref<1x128xf32, #tpu.memory_space<vmem>>, vector<1x128xf32>
    %c0_39 = arith.constant 0 : index
    %c0_40 = arith.constant 0 : index
    %73 = vector.load %arg13[%c0_39, %c0_40] : memref<1x128xf32, #tpu.memory_space<vmem>>, vector<1x128xf32>
    %cst_41 = arith.constant dense<0.000000e+00> : vector<8xf32>
    %74 = vector.multi_reduction <add>, %71, %cst_41 [1] : vector<8x128xf32> to vector<8xf32>
    %75 = vector.shape_cast %74 : vector<8xf32> to vector<8x1xf32>
    %cst_42 = arith.constant 3.125000e-02 : f32
    %76 = vector.broadcast %cst_42 : f32 to vector<8x1xf32>
    %77 = arith.mulf %75, %76 : vector<8x1xf32>
    %78 = arith.mulf %71, %71 : vector<8x128xf32>
    %cst_43 = arith.constant dense<0.000000e+00> : vector<8xf32>
    %79 = vector.multi_reduction <add>, %78, %cst_43 [1] : vector<8x128xf32> to vector<8xf32>
    %80 = vector.shape_cast %79 : vector<8xf32> to vector<8x1xf32>
    %cst_44 = arith.constant 3.125000e-02 : f32
    %81 = vector.broadcast %cst_44 : f32 to vector<8x1xf32>
    %82 = arith.mulf %80, %81 : vector<8x1xf32>
    %83 = arith.mulf %77, %77 : vector<8x1xf32>
    %84 = arith.subf %82, %83 : vector<8x1xf32>
    %cst_45 = arith.constant 0.000000e+00 : f32
    %85 = vector.broadcast %cst_45 : f32 to vector<8x1xf32>
    %86 = arith.maximumf %84, %85 : vector<8x1xf32>
    %cst_46 = arith.constant 9.99999974E-6 : f32
    %87 = vector.broadcast %cst_46 : f32 to vector<8x1xf32>
    %88 = arith.addf %86, %87 : vector<8x1xf32>
    %89 = math.rsqrt %88 : vector<8x1xf32>
    %90 = vector.broadcast %77 : vector<8x1xf32> to vector<8x128xf32>
    %91 = arith.subf %71, %90 : vector<8x128xf32>
    %92 = vector.broadcast %89 : vector<8x1xf32> to vector<8x128xf32>
    %93 = arith.mulf %91, %92 : vector<8x128xf32>
    %94 = vector.broadcast %72 : vector<1x128xf32> to vector<8x128xf32>
    %95 = arith.mulf %93, %94 : vector<8x128xf32>
    %96 = vector.broadcast %73 : vector<1x128xf32> to vector<8x128xf32>
    %97 = arith.addf %95, %96 : vector<8x128xf32>
    %c0_47 = arith.constant 0 : index
    %c0_48 = arith.constant 0 : index
    %98 = vector.load %arg14[%c0_47, %c0_48] : memref<8x128xf32, #tpu.memory_space<vmem>>, vector<8x128xf32>
    tpu.vector_store %arg14[%c0_47, %c0_48], %97 {strides = array<i32>} : memref<8x128xf32, #tpu.memory_space<vmem>>, vector<8x128xf32>,
    return
  }
  func.func @transform_0(%arg0: i32) -> (i32, i32) {
    %c0_i32 = arith.constant 0 : i32
    %c0_i32_0 = arith.constant 0 : i32
    return %arg0, %c0_i32 : i32, i32
  }
  func.func @transform_1(%arg0: i32) -> (i32, i32) {
    %c0_i32 = arith.constant 0 : i32
    %c0_i32_0 = arith.constant 0 : i32
    %c0_i32_1 = arith.constant 0 : i32
    return %c0_i32, %c0_i32_0 : i32, i32
  }
  func.func @transform_2(%arg0: i32) -> (i32, i32) {
    %c0_i32 = arith.constant 0 : i32
    %c0_i32_0 = arith.constant 0 : i32
    %c0_i32_1 = arith.constant 0 : i32
    return %c0_i32, %c0_i32_0 : i32, i32
  }
  func.func @transform_3(%arg0: i32) -> (i32, i32) {
    %c0_i32 = arith.constant 0 : i32
    %c0_i32_0 = arith.constant 0 : i32
    %c0_i32_1 = arith.constant 0 : i32
    return %c0_i32, %c0_i32_0 : i32, i32
  }
  func.func @transform_4(%arg0: i32) -> (i32, i32) {
    %c0_i32 = arith.constant 0 : i32
    %c0_i32_0 = arith.constant 0 : i32
    %c0_i32_1 = arith.constant 0 : i32
    return %c0_i32, %c0_i32_0 : i32, i32
  }
  func.func @transform_5(%arg0: i32) -> (i32, i32) {
    %c0_i32 = arith.constant 0 : i32
    %c0_i32_0 = arith.constant 0 : i32
    %c0_i32_1 = arith.constant 0 : i32
    return %c0_i32, %c0_i32_0 : i32, i32
  }
  func.func @transform_6(%arg0: i32) -> (i32, i32) {
    %c0_i32 = arith.constant 0 : i32
    %c0_i32_0 = arith.constant 0 : i32
    %c0_i32_1 = arith.constant 0 : i32
    return %c0_i32, %c0_i32_0 : i32, i32
  }
  func.func @transform_7(%arg0: i32) -> (i32, i32) {
    %c0_i32 = arith.constant 0 : i32
    %c0_i32_0 = arith.constant 0 : i32
    %c0_i32_1 = arith.constant 0 : i32
    return %c0_i32, %c0_i32_0 : i32, i32
  }
  func.func @transform_8(%arg0: i32) -> (i32, i32) {
    %c0_i32 = arith.constant 0 : i32
    %c0_i32_0 = arith.constant 0 : i32
    %c0_i32_1 = arith.constant 0 : i32
    return %c0_i32, %c0_i32_0 : i32, i32
  }
  func.func @transform_9(%arg0: i32) -> (i32, i32) {
    %c0_i32 = arith.constant 0 : i32
    %c0_i32_0 = arith.constant 0 : i32
    %c0_i32_1 = arith.constant 0 : i32
    return %c0_i32, %c0_i32_0 : i32, i32
  }
  func.func @transform_10(%arg0: i32) -> (i32, i32) {
    %c0_i32 = arith.constant 0 : i32
    %c0_i32_0 = arith.constant 0 : i32
    %c0_i32_1 = arith.constant 0 : i32
    return %c0_i32, %c0_i32_0 : i32, i32
  }
  func.func @transform_11(%arg0: i32) -> (i32, i32) {
    %c0_i32 = arith.constant 0 : i32
    %c0_i32_0 = arith.constant 0 : i32
    %c0_i32_1 = arith.constant 0 : i32
    return %c0_i32, %c0_i32_0 : i32, i32
  }
  func.func @transform_12(%arg0: i32) -> (i32, i32) {
    %c0_i32 = arith.constant 0 : i32
    %c0_i32_0 = arith.constant 0 : i32
    %c0_i32_1 = arith.constant 0 : i32
    return %c0_i32, %c0_i32_0 : i32, i32
  }
  func.func @transform_13(%arg0: i32) -> (i32, i32) {
    %c0_i32 = arith.constant 0 : i32
    %c0_i32_0 = arith.constant 0 : i32
    return %arg0, %c0_i32 : i32, i32
  }
}

module attributes {stable_mosaic.version = 11 : i64} {
  func.func @_projection_kernel(%arg0: i32, %arg1: memref<8x128xf32, #tpu.memory_space<vmem>>, %arg2: memref<128x128xf32, #tpu.memory_space<vmem>>, %arg3: memref<1x128xf32, #tpu.memory_space<vmem>>, %arg4: memref<1x128xf32, #tpu.memory_space<vmem>>, %arg5: memref<1x128xf32, #tpu.memory_space<vmem>>, %arg6: memref<128x128xf32, #tpu.memory_space<vmem>>, %arg7: memref<1x128xf32, #tpu.memory_space<vmem>>, %arg8: memref<1x128xf32, #tpu.memory_space<vmem>>, %arg9: memref<1x128xf32, #tpu.memory_space<vmem>>, %arg10: memref<128x128xf32, #tpu.memory_space<vmem>>, %arg11: memref<1x128xf32, #tpu.memory_space<vmem>>, %arg12: memref<1x128xf32, #tpu.memory_space<vmem>>, %arg13: memref<1x128xf32, #tpu.memory_space<vmem>>, %arg14: memref<8x128xf32, #tpu.memory_space<vmem>>) attributes {dimension_semantics = [#tpu.dimension_semantics<parallel>], iteration_bounds = array<i64: 1>, scalar_prefetch = 0 : i64, scratch_operands = 0 : i64, tpu.core_type = #tpu.core_type<tc>, window_params = [{transform_indices = @transform_0, window_bounds = array<i64: 8, 128>}, {pipeline_mode = #tpu.pipeline_mode<synchronous>, transform_indices = @transform_1, window_bounds = array<i64: 128, 128>}, {pipeline_mode = #tpu.pipeline_mode<synchronous>, transform_indices = @transform_2, window_bounds = array<i64: 1, 128>}, {pipeline_mode = #tpu.pipeline_mode<synchronous>, transform_indices = @transform_3, window_bounds = array<i64: 1, 128>}, {pipeline_mode = #tpu.pipeline_mode<synchronous>, transform_indices = @transform_4, window_bounds = array<i64: 1, 128>}, {pipeline_mode = #tpu.pipeline_mode<synchronous>, transform_indices = @transform_5, window_bounds = array<i64: 128, 128>}, {pipeline_mode = #tpu.pipeline_mode<synchronous>, transform_indices = @transform_6, window_bounds = array<i64: 1, 128>}, {pipeline_mode = #tpu.pipeline_mode<synchronous>, transform_indices = @transform_7, window_bounds = array<i64: 1, 128>}, {pipeline_mode = #tpu.pipeline_mode<synchronous>, transform_indices = @transform_8, window_bounds = array<i64: 1, 128>}, {pipeline_mode = #tpu.pipeline_mode<synchronous>, transform_indices = @transform_9, window_bounds = array<i64: 128, 128>}, {pipeline_mode = #tpu.pipeline_mode<synchronous>, transform_indices = @transform_10, window_bounds = array<i64: 1, 128>}, {pipeline_mode = #tpu.pipeline_mode<synchronous>, transform_indices = @transform_11, window_bounds = array<i64: 1, 128>}, {pipeline_mode = #tpu.pipeline_mode<synchronous>, transform_indices = @transform_12, window_bounds = array<i64: 1, 128>}, {transform_indices = @transform_13, window_bounds = array<i64: 8, 128>}]} {
    %c0 = arith.constant 0 : index
    %c0_0 = arith.constant 0 : index
    %0 = vector.load %arg1[%c0, %c0_0] : memref<8x128xf32, #tpu.memory_space<vmem>>, vector<8x128xf32>
    %c0_1 = arith.constant 0 : index
    %c0_2 = arith.constant 0 : index
    %1 = vector.load %arg2[%c0_1, %c0_2] : memref<128x128xf32, #tpu.memory_space<vmem>>, vector<128x128xf32>
    %cst = arith.constant dense<0.000000e+00> : vector<8x128xf32>
    %2 = tpu.matmul %0, %1, %cst {dimension_numbers = #tpu.dot_dimension_numbers<[1], [0], [0], [1], [0, 0, 1, 1], [], []>} : vector<8x128xf32>, vector<128x128xf32>, vector<8x128xf32> -> vector<8x128xf32>
    %c0_3 = arith.constant 0 : index
    %c0_4 = arith.constant 0 : index
    %3 = vector.load %arg3[%c0_3, %c0_4] : memref<1x128xf32, #tpu.memory_space<vmem>>, vector<1x128xf32>
    %4 = vector.broadcast %3 : vector<1x128xf32> to vector<8x128xf32>
    %5 = arith.addf %2, %4 : vector<8x128xf32>
    %c0_5 = arith.constant 0 : index
    %c0_6 = arith.constant 0 : index
    %6 = vector.load %arg4[%c0_5, %c0_6] : memref<1x128xf32, #tpu.memory_space<vmem>>, vector<1x128xf32>
    %c0_7 = arith.constant 0 : index
    %c0_8 = arith.constant 0 : index
    %7 = vector.load %arg5[%c0_7, %c0_8] : memref<1x128xf32, #tpu.memory_space<vmem>>, vector<1x128xf32>
    %cst_9 = arith.constant dense<0.000000e+00> : vector<8xf32>
    %8 = vector.multi_reduction <add>, %5, %cst_9 [1] : vector<8x128xf32> to vector<8xf32>
    %9 = vector.shape_cast %8 : vector<8xf32> to vector<8x1xf32>
    %cst_10 = arith.constant 1.562500e-02 : f32
    %10 = vector.broadcast %cst_10 : f32 to vector<8x1xf32>
    %11 = arith.mulf %9, %10 : vector<8x1xf32>
    %12 = arith.mulf %5, %5 : vector<8x128xf32>
    %cst_11 = arith.constant dense<0.000000e+00> : vector<8xf32>
    %13 = vector.multi_reduction <add>, %12, %cst_11 [1] : vector<8x128xf32> to vector<8xf32>
    %14 = vector.shape_cast %13 : vector<8xf32> to vector<8x1xf32>
    %cst_12 = arith.constant 1.562500e-02 : f32
    %15 = vector.broadcast %cst_12 : f32 to vector<8x1xf32>
    %16 = arith.mulf %14, %15 : vector<8x1xf32>
    %17 = arith.mulf %11, %11 : vector<8x1xf32>
    %18 = arith.subf %16, %17 : vector<8x1xf32>
    %cst_13 = arith.constant 0.000000e+00 : f32
    %19 = vector.broadcast %cst_13 : f32 to vector<8x1xf32>
    %20 = arith.maximumf %18, %19 : vector<8x1xf32>
    %cst_14 = arith.constant 9.99999974E-6 : f32
    %21 = vector.broadcast %cst_14 : f32 to vector<8x1xf32>
    %22 = arith.addf %20, %21 : vector<8x1xf32>
    %23 = math.rsqrt %22 : vector<8x1xf32>
    %24 = vector.broadcast %11 : vector<8x1xf32> to vector<8x128xf32>
    %25 = arith.subf %5, %24 : vector<8x128xf32>
    %26 = vector.broadcast %23 : vector<8x1xf32> to vector<8x128xf32>
    %27 = arith.mulf %25, %26 : vector<8x128xf32>
    %28 = vector.broadcast %6 : vector<1x128xf32> to vector<8x128xf32>
    %29 = arith.mulf %27, %28 : vector<8x128xf32>
    %30 = vector.broadcast %7 : vector<1x128xf32> to vector<8x128xf32>
    %31 = arith.addf %29, %30 : vector<8x128xf32>
    %cst_15 = arith.constant 0.000000e+00 : f32
    %32 = vector.broadcast %cst_15 : f32 to vector<8x128xf32>
    %33 = arith.maximumf %31, %32 : vector<8x128xf32>
    %c0_16 = arith.constant 0 : index
    %c0_17 = arith.constant 0 : index
    %34 = vector.load %arg6[%c0_16, %c0_17] : memref<128x128xf32, #tpu.memory_space<vmem>>, vector<128x128xf32>
    %cst_18 = arith.constant dense<0.000000e+00> : vector<8x128xf32>
    %35 = tpu.matmul %33, %34, %cst_18 {dimension_numbers = #tpu.dot_dimension_numbers<[1], [0], [0], [1], [0, 0, 1, 1], [], []>} : vector<8x128xf32>, vector<128x128xf32>, vector<8x128xf32> -> vector<8x128xf32>
    %c0_19 = arith.constant 0 : index
    %c0_20 = arith.constant 0 : index
    %36 = vector.load %arg7[%c0_19, %c0_20] : memref<1x128xf32, #tpu.memory_space<vmem>>, vector<1x128xf32>
    %37 = vector.broadcast %36 : vector<1x128xf32> to vector<8x128xf32>
    %38 = arith.addf %35, %37 : vector<8x128xf32>
    %c0_21 = arith.constant 0 : index
    %c0_22 = arith.constant 0 : index
    %39 = vector.load %arg8[%c0_21, %c0_22] : memref<1x128xf32, #tpu.memory_space<vmem>>, vector<1x128xf32>
    %c0_23 = arith.constant 0 : index
    %c0_24 = arith.constant 0 : index
    %40 = vector.load %arg9[%c0_23, %c0_24] : memref<1x128xf32, #tpu.memory_space<vmem>>, vector<1x128xf32>
    %cst_25 = arith.constant dense<0.000000e+00> : vector<8xf32>
    %41 = vector.multi_reduction <add>, %38, %cst_25 [1] : vector<8x128xf32> to vector<8xf32>
    %42 = vector.shape_cast %41 : vector<8xf32> to vector<8x1xf32>
    %cst_26 = arith.constant 1.562500e-02 : f32
    %43 = vector.broadcast %cst_26 : f32 to vector<8x1xf32>
    %44 = arith.mulf %42, %43 : vector<8x1xf32>
    %45 = arith.mulf %38, %38 : vector<8x128xf32>
    %cst_27 = arith.constant dense<0.000000e+00> : vector<8xf32>
    %46 = vector.multi_reduction <add>, %45, %cst_27 [1] : vector<8x128xf32> to vector<8xf32>
    %47 = vector.shape_cast %46 : vector<8xf32> to vector<8x1xf32>
    %cst_28 = arith.constant 1.562500e-02 : f32
    %48 = vector.broadcast %cst_28 : f32 to vector<8x1xf32>
    %49 = arith.mulf %47, %48 : vector<8x1xf32>
    %50 = arith.mulf %44, %44 : vector<8x1xf32>
    %51 = arith.subf %49, %50 : vector<8x1xf32>
    %cst_29 = arith.constant 0.000000e+00 : f32
    %52 = vector.broadcast %cst_29 : f32 to vector<8x1xf32>
    %53 = arith.maximumf %51, %52 : vector<8x1xf32>
    %cst_30 = arith.constant 9.99999974E-6 : f32
    %54 = vector.broadcast %cst_30 : f32 to vector<8x1xf32>
    %55 = arith.addf %53, %54 : vector<8x1xf32>
    %56 = math.rsqrt %55 : vector<8x1xf32>
    %57 = vector.broadcast %44 : vector<8x1xf32> to vector<8x128xf32>
    %58 = arith.subf %38, %57 : vector<8x128xf32>
    %59 = vector.broadcast %56 : vector<8x1xf32> to vector<8x128xf32>
    %60 = arith.mulf %58, %59 : vector<8x128xf32>
    %61 = vector.broadcast %39 : vector<1x128xf32> to vector<8x128xf32>
    %62 = arith.mulf %60, %61 : vector<8x128xf32>
    %63 = vector.broadcast %40 : vector<1x128xf32> to vector<8x128xf32>
    %64 = arith.addf %62, %63 : vector<8x128xf32>
    %cst_31 = arith.constant 0.000000e+00 : f32
    %65 = vector.broadcast %cst_31 : f32 to vector<8x128xf32>
    %66 = arith.maximumf %64, %65 : vector<8x128xf32>
    %c0_32 = arith.constant 0 : index
    %c0_33 = arith.constant 0 : index
    %67 = vector.load %arg10[%c0_32, %c0_33] : memref<128x128xf32, #tpu.memory_space<vmem>>, vector<128x128xf32>
    %cst_34 = arith.constant dense<0.000000e+00> : vector<8x128xf32>
    %68 = tpu.matmul %66, %67, %cst_34 {dimension_numbers = #tpu.dot_dimension_numbers<[1], [0], [0], [1], [0, 0, 1, 1], [], []>} : vector<8x128xf32>, vector<128x128xf32>, vector<8x128xf32> -> vector<8x128xf32>
    %c0_35 = arith.constant 0 : index
    %c0_36 = arith.constant 0 : index
    %69 = vector.load %arg11[%c0_35, %c0_36] : memref<1x128xf32, #tpu.memory_space<vmem>>, vector<1x128xf32>
    %70 = vector.broadcast %69 : vector<1x128xf32> to vector<8x128xf32>
    %71 = arith.addf %68, %70 : vector<8x128xf32>
    %c0_37 = arith.constant 0 : index
    %c0_38 = arith.constant 0 : index
    %72 = vector.load %arg12[%c0_37, %c0_38] : memref<1x128xf32, #tpu.memory_space<vmem>>, vector<1x128xf32>
    %c0_39 = arith.constant 0 : index
    %c0_40 = arith.constant 0 : index
    %73 = vector.load %arg13[%c0_39, %c0_40] : memref<1x128xf32, #tpu.memory_space<vmem>>, vector<1x128xf32>
    %cst_41 = arith.constant dense<0.000000e+00> : vector<8xf32>
    %74 = vector.multi_reduction <add>, %71, %cst_41 [1] : vector<8x128xf32> to vector<8xf32>
    %75 = vector.shape_cast %74 : vector<8xf32> to vector<8x1xf32>
    %cst_42 = arith.constant 3.125000e-02 : f32
    %76 = vector.broadcast %cst_42 : f32 to vector<8x1xf32>
    %77 = arith.mulf %75, %76 : vector<8x1xf32>
    %78 = arith.mulf %71, %71 : vector<8x128xf32>
    %cst_43 = arith.constant dense<0.000000e+00> : vector<8xf32>
    %79 = vector.multi_reduction <add>, %78, %cst_43 [1] : vector<8x128xf32> to vector<8xf32>
    %80 = vector.shape_cast %79 : vector<8xf32> to vector<8x1xf32>
    %cst_44 = arith.constant 3.125000e-02 : f32
    %81 = vector.broadcast %cst_44 : f32 to vector<8x1xf32>
    %82 = arith.mulf %80, %81 : vector<8x1xf32>
    %83 = arith.mulf %77, %77 : vector<8x1xf32>
    %84 = arith.subf %82, %83 : vector<8x1xf32>
    %cst_45 = arith.constant 0.000000e+00 : f32
    %85 = vector.broadcast %cst_45 : f32 to vector<8x1xf32>
    %86 = arith.maximumf %84, %85 : vector<8x1xf32>
    %cst_46 = arith.constant 9.99999974E-6 : f32
    %87 = vector.broadcast %cst_46 : f32 to vector<8x1xf32>
    %88 = arith.addf %86, %87 : vector<8x1xf32>
    %89 = math.rsqrt %88 : vector<8x1xf32>
    %90 = vector.broadcast %77 : vector<8x1xf32> to vector<8x128xf32>
    %91 = arith.subf %71, %90 : vector<8x128xf32>
    %92 = vector.broadcast %89 : vector<8x1xf32> to vector<8x128xf32>
    %93 = arith.mulf %91, %92 : vector<8x128xf32>
    %94 = vector.broadcast %72 : vector<1x128xf32> to vector<8x128xf32>
    %95 = arith.mulf %93, %94 : vector<8x128xf32>
    %96 = vector.broadcast %73 : vector<1x128xf32> to vector<8x128xf32>
    %97 = arith.addf %95, %96 : vector<8x128xf32>
    %c0_47 = arith.constant 0 : index
    %c0_48 = arith.constant 0 : index
    %98 = vector.load %arg14[%c0_47, %c0_48] : memref<8x128xf32, #tpu.memory_space<vmem>>, vector<8x128xf32>
    tpu.vector_store %arg14[%c0_47, %c0_48], %97 {strides = array<i32>} : memref<8x128xf32, #tpu.memory_space<vmem>>, vector<8x128xf32>,
    return
  }
  func.func @transform_0(%arg0: i32) -> (i32, i32) {
    %c0_i32 = arith.constant 0 : i32
    %c0_i32_0 = arith.constant 0 : i32
    return %arg0, %c0_i32 : i32, i32
  }
  func.func @transform_1(%arg0: i32) -> (i32, i32) {
    %c0_i32 = arith.constant 0 : i32
    %c0_i32_0 = arith.constant 0 : i32
    %c0_i32_1 = arith.constant 0 : i32
    return %c0_i32, %c0_i32_0 : i32, i32
  }
  func.func @transform_2(%arg0: i32) -> (i32, i32) {
    %c0_i32 = arith.constant 0 : i32
    %c0_i32_0 = arith.constant 0 : i32
    %c0_i32_1 = arith.constant 0 : i32
    return %c0_i32, %c0_i32_0 : i32, i32
  }
  func.func @transform_3(%arg0: i32) -> (i32, i32) {
    %c0_i32 = arith.constant 0 : i32
    %c0_i32_0 = arith.constant 0 : i32
    %c0_i32_1 = arith.constant 0 : i32
    return %c0_i32, %c0_i32_0 : i32, i32
  }
  func.func @transform_4(%arg0: i32) -> (i32, i32) {
    %c0_i32 = arith.constant 0 : i32
    %c0_i32_0 = arith.constant 0 : i32
    %c0_i32_1 = arith.constant 0 : i32
    return %c0_i32, %c0_i32_0 : i32, i32
  }
  func.func @transform_5(%arg0: i32) -> (i32, i32) {
    %c0_i32 = arith.constant 0 : i32
    %c0_i32_0 = arith.constant 0 : i32
    %c0_i32_1 = arith.constant 0 : i32
    return %c0_i32, %c0_i32_0 : i32, i32
  }
  func.func @transform_6(%arg0: i32) -> (i32, i32) {
    %c0_i32 = arith.constant 0 : i32
    %c0_i32_0 = arith.constant 0 : i32
    %c0_i32_1 = arith.constant 0 : i32
    return %c0_i32, %c0_i32_0 : i32, i32
  }
  func.func @transform_7(%arg0: i32) -> (i32, i32) {
    %c0_i32 = arith.constant 0 : i32
    %c0_i32_0 = arith.constant 0 : i32
    %c0_i32_1 = arith.constant 0 : i32
    return %c0_i32, %c0_i32_0 : i32, i32
  }
  func.func @transform_8(%arg0: i32) -> (i32, i32) {
    %c0_i32 = arith.constant 0 : i32
    %c0_i32_0 = arith.constant 0 : i32
    %c0_i32_1 = arith.constant 0 : i32
    return %c0_i32, %c0_i32_0 : i32, i32
  }
  func.func @transform_9(%arg0: i32) -> (i32, i32) {
    %c0_i32 = arith.constant 0 : i32
    %c0_i32_0 = arith.constant 0 : i32
    %c0_i32_1 = arith.constant 0 : i32
    return %c0_i32, %c0_i32_0 : i32, i32
  }
  func.func @transform_10(%arg0: i32) -> (i32, i32) {
    %c0_i32 = arith.constant 0 : i32
    %c0_i32_0 = arith.constant 0 : i32
    %c0_i32_1 = arith.constant 0 : i32
    return %c0_i32, %c0_i32_0 : i32, i32
  }
  func.func @transform_11(%arg0: i32) -> (i32, i32) {
    %c0_i32 = arith.constant 0 : i32
    %c0_i32_0 = arith.constant 0 : i32
    %c0_i32_1 = arith.constant 0 : i32
    return %c0_i32, %c0_i32_0 : i32, i32
  }
  func.func @transform_12(%arg0: i32) -> (i32, i32) {
    %c0_i32 = arith.constant 0 : i32
    %c0_i32_0 = arith.constant 0 : i32
    %c0_i32_1 = arith.constant 0 : i32
    return %c0_i32, %c0_i32_0 : i32, i32
  }
  func.func @transform_13(%arg0: i32) -> (i32, i32) {
    %c0_i32 = arith.constant 0 : i32
    %c0_i32_0 = arith.constant 0 : i32
    return %arg0, %c0_i32 : i32, i32
  }
}

</mosaic_0001>

<llo_original>
// kernel: _projection_impl.1
$region0: #{_projection_impl.1}
  #allocation0 [shape = 'u32[]', space=smem, size = 0x4, offset = 0x4, fixed_abs, tag = 'smem constant byte address 0x4 - core index']
  #allocation1 [shape = 'u32[72,128]{1,0:T(1,128)}', space=vmem, size = 0x9000, scoped, tag = 'internal scratch']
  %s0 = inlined_call_operand.hbm [shape: f32[8,128], index: 0, kind: input, shape index: {}]
  %s1 = inlined_call_operand.hbm [shape: f32[128,128], index: 1, kind: input, shape index: {}]
  %s2 = inlined_call_operand.vmem [shape: f32[1,128], index: 2, kind: input, shape index: {}]
  %s3 = inlined_call_operand.vmem [shape: f32[1,128], index: 3, kind: input, shape index: {}]
  %s4 = inlined_call_operand.vmem [shape: f32[1,128], index: 4, kind: input, shape index: {}]
  %s5 = inlined_call_operand.hbm [shape: f32[128,128], index: 5, kind: input, shape index: {}]
  %s6 = inlined_call_operand.vmem [shape: f32[1,128], index: 6, kind: input, shape index: {}]
  %s7 = inlined_call_operand.vmem [shape: f32[1,128], index: 7, kind: input, shape index: {}]
  %s8 = inlined_call_operand.vmem [shape: f32[1,128], index: 8, kind: input, shape index: {}]
  %s9 = inlined_call_operand.hbm [shape: f32[128,128], index: 9, kind: input, shape index: {}]
  %s10 = inlined_call_operand.vmem [shape: f32[1,128], index: 10, kind: input, shape index: {}]
  %s11 = inlined_call_operand.vmem [shape: f32[1,128], index: 11, kind: input, shape index: {}]
  %s12 = inlined_call_operand.vmem [shape: f32[1,128], index: 12, kind: input, shape index: {}]
  %s13 = inlined_call_operand.hbm [shape: f32[8,128], index: 13, kind: output, shape index: {}]
  %s14 = sld [smem:[#allocation0]]
  $region78: #{_projection_impl.1} parent=0
    _
  %s16 = ssub.s32 1, %s14
  %s17 = scalar_select 0, %s16, %s14
  $region1: #{_projection_impl.1} parent=0
    #allocation2 [shape = 'u8[4096]{0}', space=vmem, size = 0x1000, scoped, tag = 'input window, operand 0, single buffered']
    #allocation3 [shape = 's32[1]{0}', space=sflag, size = 0x4, scoped, tag = 'scoped memory for _projection_impl.1']
    #allocation4 [shape = 's32[1]{0}', space=sflag, size = 0x4, scoped, tag = 'scoped memory for _projection_impl.1']
    #allocation5 [shape = 'u8[65536]{0}', space=vmem, size = 0x10000, scoped, tag = 'input window, operand 1, single buffered']
    #allocation6 [shape = 's32[1]{0}', space=sflag, size = 0x4, scoped, tag = 'scoped memory for _projection_impl.1']
    #allocation7 [shape = 'u8[65536]{0}', space=vmem, size = 0x10000, scoped, tag = 'input window, operand 5, single buffered']
    #allocation8 [shape = 'u8[65536]{0}', space=vmem, size = 0x10000, scoped, tag = 'input window, operand 9, single buffered']
    #allocation9 [shape = 's32[1]{0}', space=sflag, size = 0x4, scoped, tag = 'scoped memory for _projection_impl.1']
    #allocation10 [shape = 'u8[4096]{0}', space=vmem, size = 0x1000, scoped, tag = 'output window, operand 0, single buffered']
    %18 = vsyncpa [#allocation3], 0
    %19 = vsyncpa [#allocation6], 0
    %20 = vsyncpa [#allocation9], 0
    %21 = vsyncpa [#allocation4], 0
    // Predicated region
    $region2: #{_projection_impl.1} parent=1 // pred_check
      _
    $region3: #{_projection_impl.1} parent=1 // pred_check_branch
      %23 = sbr.rel (0) target = $region5
    $region4: #{_projection_impl.1} parent=1 // pred_region
      %25 = vsyncadd [#allocation3], 0
      %s27 = sshll.u32 %s0, 4
      %s28 = int_to_ptr.hbm [resolvable:$true] %s27
      %s29 = sshll.u32 [#allocation2], 4
      %s30 = int_to_ptr.vmem [resolvable:$true] %s29
      %32 = dma.hbm_to_vmem [thread:$0]  %s28, 128, %s30, [#allocation3]
    $region5: #{_projection_impl.1} parent=1 // pred_fallthru
      _
    // Predicated region
    $region6: #{_projection_impl.1} parent=1 // pred_check
      _
    $region7: #{_projection_impl.1} parent=1 // pred_check_branch
      %34 = sbr.rel (0) target = $region9
    $region8: #{_projection_impl.1} parent=1 // pred_region
      %36 = vsyncadd [#allocation6], 0
      %s37 = sshll.u32 %s1, 4
      %s38 = int_to_ptr.hbm [resolvable:$true] %s37
      %s39 = sshll.u32 [#allocation5], 4
      %s40 = int_to_ptr.vmem [resolvable:$true] %s39
      %45 = dma.hbm_to_vmem [thread:$0]  %s38, 2048, %s40, [#allocation6], 128, 128, 8
    $region9: #{_projection_impl.1} parent=1 // pred_fallthru
      _
    // Predicated region
    $region10: #{_projection_impl.1} parent=1 // pred_check
      _
    $region11: #{_projection_impl.1} parent=1 // pred_check_branch
      %47 = sbr.rel (0) target = $region13
    $region12: #{_projection_impl.1} parent=1 // pred_region
      _
    $region13: #{_projection_impl.1} parent=1 // pred_fallthru
      _
    // Predicated region
    $region14: #{_projection_impl.1} parent=1 // pred_check
      _
    $region15: #{_projection_impl.1} parent=1 // pred_check_branch
      %49 = sbr.rel (0) target = $region17
    $region16: #{_projection_impl.1} parent=1 // pred_region
      _
    $region17: #{_projection_impl.1} parent=1 // pred_fallthru
      _
    // Predicated region
    $region18: #{_projection_impl.1} parent=1 // pred_check
      _
    $region19: #{_projection_impl.1} parent=1 // pred_check_branch
      %51 = sbr.rel (0) target = $region21
    $region20: #{_projection_impl.1} parent=1 // pred_region
      _
    $region21: #{_projection_impl.1} parent=1 // pred_fallthru
      _
    // Predicated region
    $region22: #{_projection_impl.1} parent=1 // pred_check
      _
    $region23: #{_projection_impl.1} parent=1 // pred_check_branch
      %53 = sbr.rel (0) target = $region25
    $region24: #{_projection_impl.1} parent=1 // pred_region
      %55 = vsyncadd [#allocation6], 0
      %s56 = sshll.u32 %s5, 4
      %s57 = int_to_ptr.hbm [resolvable:$true] %s56
      %s58 = sshll.u32 [#allocation7], 4
      %s59 = int_to_ptr.vmem [resolvable:$true] %s58
      %64 = dma.hbm_to_vmem [thread:$0]  %s57, 2048, %s59, [#allocation6], 128, 128, 8
    $region25: #{_projection_impl.1} parent=1 // pred_fallthru
      _
    // Predicated region
    $region26: #{_projection_impl.1} parent=1 // pred_check
      _
    $region27: #{_projection_impl.1} parent=1 // pred_check_branch
      %66 = sbr.rel (0) target = $region29
    $region28: #{_projection_impl.1} parent=1 // pred_region
      _
    $region29: #{_projection_impl.1} parent=1 // pred_fallthru
      _
    // Predicated region
    $region30: #{_projection_impl.1} parent=1 // pred_check
      _
    $region31: #{_projection_impl.1} parent=1 // pred_check_branch
      %68 = sbr.rel (0) target = $region33
    $region32: #{_projection_impl.1} parent=1 // pred_region
      _
    $region33: #{_projection_impl.1} parent=1 // pred_fallthru
      _
    // Predicated region
    $region34: #{_projection_impl.1} parent=1 // pred_check
      _
    $region35: #{_projection_impl.1} parent=1 // pred_check_branch
      %70 = sbr.rel (0) target = $region37
    $region36: #{_projection_impl.1} parent=1 // pred_region
      _
    $region37: #{_projection_impl.1} parent=1 // pred_fallthru
      _
    // Predicated region
    $region38: #{_projection_impl.1} parent=1 // pred_check
      _
    $region39: #{_projection_impl.1} parent=1 // pred_check_branch
      %72 = sbr.rel (0) target = $region41
    $region40: #{_projection_impl.1} parent=1 // pred_region
      %74 = vsyncadd [#allocation9], 0
      %s75 = sshll.u32 %s9, 4
      %s76 = int_to_ptr.hbm [resolvable:$true] %s75
      %s77 = sshll.u32 [#allocation8], 4
      %s78 = int_to_ptr.vmem [resolvable:$true] %s77
      %83 = dma.hbm_to_vmem [thread:$0]  %s76, 2048, %s78, [#allocation9], 128, 128, 8
    $region41: #{_projection_impl.1} parent=1 // pred_fallthru
      _
    // Predicated region
    $region42: #{_projection_impl.1} parent=1 // pred_check
      _
    $region43: #{_projection_impl.1} parent=1 // pred_check_branch
      %85 = sbr.rel (0) target = $region45
    $region44: #{_projection_impl.1} parent=1 // pred_region
      _
    $region45: #{_projection_impl.1} parent=1 // pred_fallthru
      _
    // Predicated region
    $region46: #{_projection_impl.1} parent=1 // pred_check
      _
    $region47: #{_projection_impl.1} parent=1 // pred_check_branch
      %87 = sbr.rel (0) target = $region49
    $region48: #{_projection_impl.1} parent=1 // pred_region
      _
    $region49: #{_projection_impl.1} parent=1 // pred_fallthru
      _
    // Predicated region
    $region50: #{_projection_impl.1} parent=1 // pred_check
      _
    $region51: #{_projection_impl.1} parent=1 // pred_check_branch
      %89 = sbr.rel (0) target = $region53
    $region52: #{_projection_impl.1} parent=1 // pred_region
      _
    $region53: #{_projection_impl.1} parent=1 // pred_fallthru
      _
    // Predicated region
    $region54: #{_projection_impl.1} parent=1 // pred_check
      _
    $region55: #{_projection_impl.1} parent=1 // pred_check_branch
      %91 = sbr.rel (0) target = $region57
    $region56: #{_projection_impl.1} parent=1 // pred_region
      %93 = dma.done [#allocation3], 128
    $region57: #{_projection_impl.1} parent=1 // pred_fallthru
      _
    // Predicated region
    $region58: #{_projection_impl.1} parent=1 // pred_check
      _
    $region59: #{_projection_impl.1} parent=1 // pred_check_branch
      %95 = sbr.rel (0) target = $region61
    $region60: #{_projection_impl.1} parent=1 // pred_region
      %97 = dma.done [#allocation6], 2048
    $region61: #{_projection_impl.1} parent=1 // pred_fallthru
      _
    // Predicated region
    $region62: #{_projection_impl.1} parent=1 // pred_check
      _
    $region63: #{_projection_impl.1} parent=1 // pred_check_branch
      %99 = sbr.rel (0) target = $region65
    $region64: #{_projection_impl.1} parent=1 // pred_region
      %101 = dma.done [#allocation6], 2048
    $region65: #{_projection_impl.1} parent=1 // pred_fallthru
      _
    // Predicated region
    $region66: #{_projection_impl.1} parent=1 // pred_check
      _
    $region67: #{_projection_impl.1} parent=1 // pred_check_branch
      %103 = sbr.rel (0) target = $region69
    $region68: #{_projection_impl.1} parent=1 // pred_region
      %105 = dma.done [#allocation9], 2048
    $region69: #{_projection_impl.1} parent=1 // pred_fallthru
      _
    %v106 = vld [vmem:[#allocation2] sm:$0xff]
    %v107 = vld [vmem:[#allocation5] sm:$0xff]
    %v108 = vld [vmem:[#allocation5 + $0x8] sm:$0xff]
    %v109 = vld [vmem:[#allocation5 + $0x10] sm:$0xff]
    %v110 = vld [vmem:[#allocation5 + $0x18] sm:$0xff]
    %v111 = vld [vmem:[#allocation5 + $0x20] sm:$0xff]
    %v112 = vld [vmem:[#allocation5 + $0x28] sm:$0xff]
    %v113 = vld [vmem:[#allocation5 + $0x30] sm:$0xff]
    %v114 = vld [vmem:[#allocation5 + $0x38] sm:$0xff]
    %v115 = vld [vmem:[#allocation5 + $0x40] sm:$0xff]
    %v116 = vld [vmem:[#allocation5 + $0x48] sm:$0xff]
    %v117 = vld [vmem:[#allocation5 + $0x50] sm:$0xff]
    %v118 = vld [vmem:[#allocation5 + $0x58] sm:$0xff]
    %v119 = vld [vmem:[#allocation5 + $0x60] sm:$0xff]
    %v120 = vld [vmem:[#allocation5 + $0x68] sm:$0xff]
    %v121 = vld [vmem:[#allocation5 + $0x70] sm:$0xff]
    %v122 = vld [vmem:[#allocation5 + $0x78] sm:$0xff]
    %v123 = vld [vmem:[%s2] sm:$0x1]
    %v125 = vperm.slane %v123, 0
    %127 = vmatpush.msra.mxu0 %v122
    %128 = vmatpush.msra.mxu0 %v121
    %129 = vmatpush.msra.mxu0 %v120
    %130 = vmatpush.msra.mxu0 %v119
    %131 = vmatpush.msra.mxu0 %v118
    %132 = vmatpush.msra.mxu0 %v117
    %133 = vmatpush.msra.mxu0 %v116
    %134 = vmatpush.msra.mxu0 %v115
    %135 = vmatpush.msra.mxu0 %v114
    %136 = vmatpush.msra.mxu0 %v113
    %137 = vmatpush.msra.mxu0 %v112
    %138 = vmatpush.msra.mxu0 %v111
    %139 = vmatpush.msra.mxu0 %v110
    %140 = vmatpush.msra.mxu0 %v109
    %141 = vmatpush.msra.mxu0 %v108
    %142 = vmatpush.msra.mxu0 %v107
    %143 = vmatmul.f32.gmra.mxu0 %v106
    %v144 = vpop.f32.mrf.mxu0
    %v145 = vadd.f32 %v125, %v144
    %146 = vdwg.mxu0
    %v147 = vld [vmem:[%s3] sm:$0x1]
    %v148 = vld [vmem:[%s4] sm:$0x1]
    %149 = vadd.xlane.f32.xlu0 %v145
    %v150 = vpop.xlane.xlu0 %149
    %v151 = vmul.f32 %v150, 0.015625
    %v152 = vmul.f32 %v145, %v145
    %153 = vadd.xlane.f32.xlu0 %v152
    %v154 = vpop.xlane.xlu0 %153
    %v155 = vmul.f32 %v154, 0.015625
    %v156 = vmul.f32 %v151, %v151
    %v157 = vsub.f32 %v155, %v156
    %v158 = vmax.f32 %v157, 0.0
    %v159 = vadd.f32 %v158, 1e-05
    %v160 = vrsqrt.pop %v159
    %v161 = vmul.f32 %v160, %v159
    %v162 = vmul.f32 %v161, %v160
    %v163 = vmul.f32 0.5, %v162
    %v164 = vsub.f32 1.5, %v163
    %v165 = vmul.f32 %v160, %v164
    %vm166 = vweird.f32 %v159
    %vm167 = vweird.f32 %v160
    %vm168 = vmor %vm166, %vm167
    %v169 = vsel %vm168, %v160, %v165
    %v170 = vsub.f32 %v145, %v151
    %v171 = vmul.f32 %v170, %v169
    %v173 = vperm.slane %v147, 0
    %v175 = vmul.f32 %v171, %v173
    %v177 = vperm.slane %v148, 0
    %v179 = vadd.f32 %v175, %v177
    %v180 = vmax.f32 %v179, 0.0
    %v181 = vld [vmem:[#allocation7] sm:$0xff]
    %v182 = vld [vmem:[#allocation7 + $0x8] sm:$0xff]
    %v183 = vld [vmem:[#allocation7 + $0x10] sm:$0xff]
    %v184 = vld [vmem:[#allocation7 + $0x18] sm:$0xff]
    %v185 = vld [vmem:[#allocation7 + $0x20] sm:$0xff]
    %v186 = vld [vmem:[#allocation7 + $0x28] sm:$0xff]
    %v187 = vld [vmem:[#allocation7 + $0x30] sm:$0xff]
    %v188 = vld [vmem:[#allocation7 + $0x38] sm:$0xff]
    %v189 = vld [vmem:[#allocation7 + $0x40] sm:$0xff]
    %v190 = vld [vmem:[#allocation7 + $0x48] sm:$0xff]
    %v191 = vld [vmem:[#allocation7 + $0x50] sm:$0xff]
    %v192 = vld [vmem:[#allocation7 + $0x58] sm:$0xff]
    %v193 = vld [vmem:[#allocation7 + $0x60] sm:$0xff]
    %v194 = vld [vmem:[#allocation7 + $0x68] sm:$0xff]
    %v195 = vld [vmem:[#allocation7 + $0x70] sm:$0xff]
    %v196 = vld [vmem:[#allocation7 + $0x78] sm:$0xff]
    %v197 = vld [vmem:[%s6] sm:$0x1]
    %v199 = vperm.slane %v197, 0
    %201 = vmatpush.msra.mxu0 %v196
    %202 = vmatpush.msra.mxu0 %v195
    %203 = vmatpush.msra.mxu0 %v194
    %204 = vmatpush.msra.mxu0 %v193
    %205 = vmatpush.msra.mxu0 %v192
    %206 = vmatpush.msra.mxu0 %v191
    %207 = vmatpush.msra.mxu0 %v190
    %208 = vmatpush.msra.mxu0 %v189
    %209 = vmatpush.msra.mxu0 %v188
    %210 = vmatpush.msra.mxu0 %v187
    %211 = vmatpush.msra.mxu0 %v186
    %212 = vmatpush.msra.mxu0 %v185
    %213 = vmatpush.msra.mxu0 %v184
    %214 = vmatpush.msra.mxu0 %v183
    %215 = vmatpush.msra.mxu0 %v182
    %216 = vmatpush.msra.mxu0 %v181
    %217 = vmatmul.f32.gmra.mxu0 %v180
    %v218 = vpop.f32.mrf.mxu0
    %v219 = vadd.f32 %v199, %v218
    %220 = vdwg.mxu0
    %v221 = vld [vmem:[%s7] sm:$0x1]
    %v222 = vld [vmem:[%s8] sm:$0x1]
    %223 = vadd.xlane.f32.xlu0 %v219
    %v224 = vpop.xlane.xlu0 %223
    %v225 = vmul.f32 %v224, 0.015625
    %v226 = vmul.f32 %v219, %v219
    %227 = vadd.xlane.f32.xlu0 %v226
    %v228 = vpop.xlane.xlu0 %227
    %v229 = vmul.f32 %v228, 0.015625
    %v230 = vmul.f32 %v225, %v225
    %v231 = vsub.f32 %v229, %v230
    %v232 = vmax.f32 %v231, 0.0
    %v233 = vadd.f32 %v232, 1e-05
    %v234 = vrsqrt.pop %v233
    %v235 = vmul.f32 %v234, %v233
    %v236 = vmul.f32 %v235, %v234
    %v237 = vmul.f32 0.5, %v236
    %v238 = vsub.f32 1.5, %v237
    %v239 = vmul.f32 %v234, %v238
    %vm240 = vweird.f32 %v233
    %vm241 = vweird.f32 %v234
    %vm242 = vmor %vm240, %vm241
    %v243 = vsel %vm242, %v234, %v239
    %v244 = vsub.f32 %v219, %v225
    %v245 = vmul.f32 %v244, %v243
    %v247 = vperm.slane %v221, 0
    %v249 = vmul.f32 %v245, %v247
    %v251 = vperm.slane %v222, 0
    %v253 = vadd.f32 %v249, %v251
    %v254 = vmax.f32 %v253, 0.0
    %v255 = vld [vmem:[#allocation8] sm:$0xff]
    %v256 = vld [vmem:[#allocation8 + $0x8] sm:$0xff]
    %v257 = vld [vmem:[#allocation8 + $0x10] sm:$0xff]
    %v258 = vld [vmem:[#allocation8 + $0x18] sm:$0xff]
    %v259 = vld [vmem:[#allocation8 + $0x20] sm:$0xff]
    %v260 = vld [vmem:[#allocation8 + $0x28] sm:$0xff]
    %v261 = vld [vmem:[#allocation8 + $0x30] sm:$0xff]
    %v262 = vld [vmem:[#allocation8 + $0x38] sm:$0xff]
    %v263 = vld [vmem:[#allocation8 + $0x40] sm:$0xff]
    %v264 = vld [vmem:[#allocation8 + $0x48] sm:$0xff]
    %v265 = vld [vmem:[#allocation8 + $0x50] sm:$0xff]
    %v266 = vld [vmem:[#allocation8 + $0x58] sm:$0xff]
    %v267 = vld [vmem:[#allocation8 + $0x60] sm:$0xff]
    %v268 = vld [vmem:[#allocation8 + $0x68] sm:$0xff]
    %v269 = vld [vmem:[#allocation8 + $0x70] sm:$0xff]
    %v270 = vld [vmem:[#allocation8 + $0x78] sm:$0xff]
    %v271 = vld [vmem:[%s10] sm:$0x1]
    %v273 = vperm.slane %v271, 0
    %275 = vmatpush.msra.mxu0 %v270
    %276 = vmatpush.msra.mxu0 %v269
    %277 = vmatpush.msra.mxu0 %v268
    %278 = vmatpush.msra.mxu0 %v267
    %279 = vmatpush.msra.mxu0 %v266
    %280 = vmatpush.msra.mxu0 %v265
    %281 = vmatpush.msra.mxu0 %v264
    %282 = vmatpush.msra.mxu0 %v263
    %283 = vmatpush.msra.mxu0 %v262
    %284 = vmatpush.msra.mxu0 %v261
    %285 = vmatpush.msra.mxu0 %v260
    %286 = vmatpush.msra.mxu0 %v259
    %287 = vmatpush.msra.mxu0 %v258
    %288 = vmatpush.msra.mxu0 %v257
    %289 = vmatpush.msra.mxu0 %v256
    %290 = vmatpush.msra.mxu0 %v255
    %291 = vmatmul.f32.gmra.mxu0 %v254
    %v292 = vpop.f32.mrf.mxu0
    %v293 = vadd.f32 %v273, %v292
    %294 = vdwg.mxu0
    %v295 = vld [vmem:[%s11] sm:$0x1]
    %v296 = vld [vmem:[%s12] sm:$0x1]
    %297 = vadd.xlane.f32.xlu0 %v293
    %v298 = vpop.xlane.xlu0 %297
    %v299 = vmul.f32 %v298, 0.03125
    %v300 = vmul.f32 %v293, %v293
    %301 = vadd.xlane.f32.xlu0 %v300
    %v302 = vpop.xlane.xlu0 %301
    %v303 = vmul.f32 %v302, 0.03125
    %v304 = vmul.f32 %v299, %v299
    %v305 = vsub.f32 %v303, %v304
    %v306 = vmax.f32 %v305, 0.0
    %v307 = vadd.f32 %v306, 1e-05
    %v308 = vrsqrt.pop %v307
    %v309 = vmul.f32 %v308, %v307
    %v310 = vmul.f32 %v309, %v308
    %v311 = vmul.f32 0.5, %v310
    %v312 = vsub.f32 1.5, %v311
    %v313 = vmul.f32 %v308, %v312
    %vm314 = vweird.f32 %v307
    %vm315 = vweird.f32 %v308
    %vm316 = vmor %vm314, %vm315
    %v317 = vsel %vm316, %v308, %v313
    %v318 = vsub.f32 %v293, %v299
    %v319 = vmul.f32 %v318, %v317
    %v321 = vperm.slane %v295, 0
    %v323 = vmul.f32 %v319, %v321
    %v325 = vperm.slane %v296, 0
    %v327 = vadd.f32 %v323, %v325
    %328 = vst [vmem:[#allocation10] sm:$0xff] %v327
    // Predicated region
    $region70: #{_projection_impl.1} parent=1 // pred_check
      _
    $region71: #{_projection_impl.1} parent=1 // pred_check_branch
      %330 = sbr.rel (0) target = $region73
    $region72: #{_projection_impl.1} parent=1 // pred_region
      %332 = vsyncadd [#allocation4], 0
      %s334 = sshll.u32 [#allocation10], 4
      %s335 = int_to_ptr.vmem [resolvable:$true] %s334
      %s336 = sshll.u32 %s13, 4
      %s337 = int_to_ptr.hbm [resolvable:$true] %s336
      %339 = dma.vmem_to_hbm [thread:$0]  %s335, 128, %s337, [#allocation4]
    $region73: #{_projection_impl.1} parent=1 // pred_fallthru
      _
    // Predicated region
    $region74: #{_projection_impl.1} parent=1 // pred_check
      _
    $region75: #{_projection_impl.1} parent=1 // pred_check_branch
      %341 = sbr.rel (0) target = $region77
    $region76: #{_projection_impl.1} parent=1 // pred_region
      %343 = dma.done [#allocation4], 128
    $region77: #{_projection_impl.1} parent=1 // pred_fallthru
      _
    %344 = vsyncpa [#allocation3], 1
    %345 = vsyncpa [#allocation6], 1
    %346 = vsyncpa [#allocation9], 1
    %347 = vsyncpa [#allocation4], 1

// kernel: _projection_impl.1
$region0: #{_projection_impl.1}
  #allocation0 [shape = 'u32[]', space=smem, size = 0x4, offset = 0x4, fixed_abs, tag = 'smem constant byte address 0x4 - core index']
  #allocation1 [shape = 'u32[72,128]{1,0:T(1,128)}', space=vmem, size = 0x9000, scoped, tag = 'internal scratch']
  %s0 = inlined_call_operand.hbm [shape: f32[8,128], index: 0, kind: input, shape index: {}]
  %s1 = inlined_call_operand.hbm [shape: f32[128,128], index: 1, kind: input, shape index: {}]
  %s2 = inlined_call_operand.vmem [shape: f32[1,128], index: 2, kind: input, shape index: {}]
  %s3 = inlined_call_operand.vmem [shape: f32[1,128], index: 3, kind: input, shape index: {}]
  %s4 = inlined_call_operand.vmem [shape: f32[1,128], index: 4, kind: input, shape index: {}]
  %s5 = inlined_call_operand.hbm [shape: f32[128,128], index: 5, kind: input, shape index: {}]
  %s6 = inlined_call_operand.vmem [shape: f32[1,128], index: 6, kind: input, shape index: {}]
  %s7 = inlined_call_operand.vmem [shape: f32[1,128], index: 7, kind: input, shape index: {}]
  %s8 = inlined_call_operand.vmem [shape: f32[1,128], index: 8, kind: input, shape index: {}]
  %s9 = inlined_call_operand.hbm [shape: f32[128,128], index: 9, kind: input, shape index: {}]
  %s10 = inlined_call_operand.vmem [shape: f32[1,128], index: 10, kind: input, shape index: {}]
  %s11 = inlined_call_operand.vmem [shape: f32[1,128], index: 11, kind: input, shape index: {}]
  %s12 = inlined_call_operand.vmem [shape: f32[1,128], index: 12, kind: input, shape index: {}]
  %s13 = inlined_call_operand.hbm [shape: f32[8,128], index: 13, kind: output, shape index: {}]
  %s14 = sld [smem:[#allocation0]]
  $region78: #{_projection_impl.1} parent=0
    _
  %s16 = ssub.s32 1, %s14
  %s17 = scalar_select 0, %s16, %s14
  $region1: #{_projection_impl.1} parent=0
    #allocation2 [shape = 'u8[4096]{0}', space=vmem, size = 0x1000, scoped, tag = 'input window, operand 0, single buffered']
    #allocation3 [shape = 's32[1]{0}', space=sflag, size = 0x4, scoped, tag = 'scoped memory for _projection_impl.1']
    #allocation4 [shape = 's32[1]{0}', space=sflag, size = 0x4, scoped, tag = 'scoped memory for _projection_impl.1']
    #allocation5 [shape = 'u8[65536]{0}', space=vmem, size = 0x10000, scoped, tag = 'input window, operand 1, single buffered']
    #allocation6 [shape = 's32[1]{0}', space=sflag, size = 0x4, scoped, tag = 'scoped memory for _projection_impl.1']
    #allocation7 [shape = 'u8[65536]{0}', space=vmem, size = 0x10000, scoped, tag = 'input window, operand 5, single buffered']
    #allocation8 [shape = 'u8[65536]{0}', space=vmem, size = 0x10000, scoped, tag = 'input window, operand 9, single buffered']
    #allocation9 [shape = 's32[1]{0}', space=sflag, size = 0x4, scoped, tag = 'scoped memory for _projection_impl.1']
    #allocation10 [shape = 'u8[4096]{0}', space=vmem, size = 0x1000, scoped, tag = 'output window, operand 0, single buffered']
    %18 = vsyncpa [#allocation3], 0
    %19 = vsyncpa [#allocation6], 0
    %20 = vsyncpa [#allocation9], 0
    %21 = vsyncpa [#allocation4], 0
    // Predicated region
    $region2: #{_projection_impl.1} parent=1 // pred_check
      _
    $region3: #{_projection_impl.1} parent=1 // pred_check_branch
      %23 = sbr.rel (0) target = $region5
    $region4: #{_projection_impl.1} parent=1 // pred_region
      %25 = vsyncadd [#allocation3], 0
      %s27 = sshll.u32 %s0, 4
      %s28 = int_to_ptr.hbm [resolvable:$true] %s27
      %s29 = sshll.u32 [#allocation2], 4
      %s30 = int_to_ptr.vmem [resolvable:$true] %s29
      %32 = dma.hbm_to_vmem [thread:$0]  %s28, 128, %s30, [#allocation3]
    $region5: #{_projection_impl.1} parent=1 // pred_fallthru
      _
    // Predicated region
    $region6: #{_projection_impl.1} parent=1 // pred_check
      _
    $region7: #{_projection_impl.1} parent=1 // pred_check_branch
      %34 = sbr.rel (0) target = $region9
    $region8: #{_projection_impl.1} parent=1 // pred_region
      %36 = vsyncadd [#allocation6], 0
      %s37 = sshll.u32 %s1, 4
      %s38 = int_to_ptr.hbm [resolvable:$true] %s37
      %s39 = sshll.u32 [#allocation5], 4
      %s40 = int_to_ptr.vmem [resolvable:$true] %s39
      %45 = dma.hbm_to_vmem [thread:$0]  %s38, 2048, %s40, [#allocation6], 128, 128, 8
    $region9: #{_projection_impl.1} parent=1 // pred_fallthru
      _
    // Predicated region
    $region10: #{_projection_impl.1} parent=1 // pred_check
      _
    $region11: #{_projection_impl.1} parent=1 // pred_check_branch
      %47 = sbr.rel (0) target = $region13
    $region12: #{_projection_impl.1} parent=1 // pred_region
      _
    $region13: #{_projection_impl.1} parent=1 // pred_fallthru
      _
    // Predicated region
    $region14: #{_projection_impl.1} parent=1 // pred_check
      _
    $region15: #{_projection_impl.1} parent=1 // pred_check_branch
      %49 = sbr.rel (0) target = $region17
    $region16: #{_projection_impl.1} parent=1 // pred_region
      _
    $region17: #{_projection_impl.1} parent=1 // pred_fallthru
      _
    // Predicated region
    $region18: #{_projection_impl.1} parent=1 // pred_check
      _
    $region19: #{_projection_impl.1} parent=1 // pred_check_branch
      %51 = sbr.rel (0) target = $region21
    $region20: #{_projection_impl.1} parent=1 // pred_region
      _
    $region21: #{_projection_impl.1} parent=1 // pred_fallthru
      _
    // Predicated region
    $region22: #{_projection_impl.1} parent=1 // pred_check
      _
    $region23: #{_projection_impl.1} parent=1 // pred_check_branch
      %53 = sbr.rel (0) target = $region25
    $region24: #{_projection_impl.1} parent=1 // pred_region
      %55 = vsyncadd [#allocation6], 0
      %s56 = sshll.u32 %s5, 4
      %s57 = int_to_ptr.hbm [resolvable:$true] %s56
      %s58 = sshll.u32 [#allocation7], 4
      %s59 = int_to_ptr.vmem [resolvable:$true] %s58
      %64 = dma.hbm_to_vmem [thread:$0]  %s57, 2048, %s59, [#allocation6], 128, 128, 8
    $region25: #{_projection_impl.1} parent=1 // pred_fallthru
      _
    // Predicated region
    $region26: #{_projection_impl.1} parent=1 // pred_check
      _
    $region27: #{_projection_impl.1} parent=1 // pred_check_branch
      %66 = sbr.rel (0) target = $region29
    $region28: #{_projection_impl.1} parent=1 // pred_region
      _
    $region29: #{_projection_impl.1} parent=1 // pred_fallthru
      _
    // Predicated region
    $region30: #{_projection_impl.1} parent=1 // pred_check
      _
    $region31: #{_projection_impl.1} parent=1 // pred_check_branch
      %68 = sbr.rel (0) target = $region33
    $region32: #{_projection_impl.1} parent=1 // pred_region
      _
    $region33: #{_projection_impl.1} parent=1 // pred_fallthru
      _
    // Predicated region
    $region34: #{_projection_impl.1} parent=1 // pred_check
      _
    $region35: #{_projection_impl.1} parent=1 // pred_check_branch
      %70 = sbr.rel (0) target = $region37
    $region36: #{_projection_impl.1} parent=1 // pred_region
      _
    $region37: #{_projection_impl.1} parent=1 // pred_fallthru
      _
    // Predicated region
    $region38: #{_projection_impl.1} parent=1 // pred_check
      _
    $region39: #{_projection_impl.1} parent=1 // pred_check_branch
      %72 = sbr.rel (0) target = $region41
    $region40: #{_projection_impl.1} parent=1 // pred_region
      %74 = vsyncadd [#allocation9], 0
      %s75 = sshll.u32 %s9, 4
      %s76 = int_to_ptr.hbm [resolvable:$true] %s75
      %s77 = sshll.u32 [#allocation8], 4
      %s78 = int_to_ptr.vmem [resolvable:$true] %s77
      %83 = dma.hbm_to_vmem [thread:$0]  %s76, 2048, %s78, [#allocation9], 128, 128, 8
    $region41: #{_projection_impl.1} parent=1 // pred_fallthru
      _
    // Predicated region
    $region42: #{_projection_impl.1} parent=1 // pred_check
      _
    $region43: #{_projection_impl.1} parent=1 // pred_check_branch
      %85 = sbr.rel (0) target = $region45
    $region44: #{_projection_impl.1} parent=1 // pred_region
      _
    $region45: #{_projection_impl.1} parent=1 // pred_fallthru
      _
    // Predicated region
    $region46: #{_projection_impl.1} parent=1 // pred_check
      _
    $region47: #{_projection_impl.1} parent=1 // pred_check_branch
      %87 = sbr.rel (0) target = $region49
    $region48: #{_projection_impl.1} parent=1 // pred_region
      _
    $region49: #{_projection_impl.1} parent=1 // pred_fallthru
      _
    // Predicated region
    $region50: #{_projection_impl.1} parent=1 // pred_check
      _
    $region51: #{_projection_impl.1} parent=1 // pred_check_branch
      %89 = sbr.rel (0) target = $region53
    $region52: #{_projection_impl.1} parent=1 // pred_region
      _
    $region53: #{_projection_impl.1} parent=1 // pred_fallthru
      _
    // Predicated region
    $region54: #{_projection_impl.1} parent=1 // pred_check
      _
    $region55: #{_projection_impl.1} parent=1 // pred_check_branch
      %91 = sbr.rel (0) target = $region57
    $region56: #{_projection_impl.1} parent=1 // pred_region
      %93 = dma.done [#allocation3], 128
    $region57: #{_projection_impl.1} parent=1 // pred_fallthru
      _
    // Predicated region
    $region58: #{_projection_impl.1} parent=1 // pred_check
      _
    $region59: #{_projection_impl.1} parent=1 // pred_check_branch
      %95 = sbr.rel (0) target = $region61
    $region60: #{_projection_impl.1} parent=1 // pred_region
      %97 = dma.done [#allocation6], 2048
    $region61: #{_projection_impl.1} parent=1 // pred_fallthru
      _
    // Predicated region
    $region62: #{_projection_impl.1} parent=1 // pred_check
      _
    $region63: #{_projection_impl.1} parent=1 // pred_check_branch
      %99 = sbr.rel (0) target = $region65
    $region64: #{_projection_impl.1} parent=1 // pred_region
      %101 = dma.done [#allocation6], 2048
    $region65: #{_projection_impl.1} parent=1 // pred_fallthru
      _
    // Predicated region
    $region66: #{_projection_impl.1} parent=1 // pred_check
      _
    $region67: #{_projection_impl.1} parent=1 // pred_check_branch
      %103 = sbr.rel (0) target = $region69
    $region68: #{_projection_impl.1} parent=1 // pred_region
      %105 = dma.done [#allocation9], 2048
    $region69: #{_projection_impl.1} parent=1 // pred_fallthru
      _
    %v106 = vld [vmem:[#allocation2] sm:$0xff]
    %v107 = vld [vmem:[#allocation5] sm:$0xff]
    %v108 = vld [vmem:[#allocation5 + $0x8] sm:$0xff]
    %v109 = vld [vmem:[#allocation5 + $0x10] sm:$0xff]
    %v110 = vld [vmem:[#allocation5 + $0x18] sm:$0xff]
    %v111 = vld [vmem:[#allocation5 + $0x20] sm:$0xff]
    %v112 = vld [vmem:[#allocation5 + $0x28] sm:$0xff]
    %v113 = vld [vmem:[#allocation5 + $0x30] sm:$0xff]
    %v114 = vld [vmem:[#allocation5 + $0x38] sm:$0xff]
    %v115 = vld [vmem:[#allocation5 + $0x40] sm:$0xff]
    %v116 = vld [vmem:[#allocation5 + $0x48] sm:$0xff]
    %v117 = vld [vmem:[#allocation5 + $0x50] sm:$0xff]
    %v118 = vld [vmem:[#allocation5 + $0x58] sm:$0xff]
    %v119 = vld [vmem:[#allocation5 + $0x60] sm:$0xff]
    %v120 = vld [vmem:[#allocation5 + $0x68] sm:$0xff]
    %v121 = vld [vmem:[#allocation5 + $0x70] sm:$0xff]
    %v122 = vld [vmem:[#allocation5 + $0x78] sm:$0xff]
    %v123 = vld [vmem:[%s2] sm:$0x1]
    %v125 = vperm.slane %v123, 0
    %127 = vmatpush.msra.mxu0 %v122
    %128 = vmatpush.msra.mxu0 %v121
    %129 = vmatpush.msra.mxu0 %v120
    %130 = vmatpush.msra.mxu0 %v119
    %131 = vmatpush.msra.mxu0 %v118
    %132 = vmatpush.msra.mxu0 %v117
    %133 = vmatpush.msra.mxu0 %v116
    %134 = vmatpush.msra.mxu0 %v115
    %135 = vmatpush.msra.mxu0 %v114
    %136 = vmatpush.msra.mxu0 %v113
    %137 = vmatpush.msra.mxu0 %v112
    %138 = vmatpush.msra.mxu0 %v111
    %139 = vmatpush.msra.mxu0 %v110
    %140 = vmatpush.msra.mxu0 %v109
    %141 = vmatpush.msra.mxu0 %v108
    %142 = vmatpush.msra.mxu0 %v107
    %143 = vmatmul.f32.gmra.mxu0 %v106
    %v144 = vpop.f32.mrf.mxu0
    %v145 = vadd.f32 %v125, %v144
    %146 = vdwg.mxu0
    %v147 = vld [vmem:[%s3] sm:$0x1]
    %v148 = vld [vmem:[%s4] sm:$0x1]
    %149 = vadd.xlane.f32.xlu0 %v145
    %v150 = vpop.xlane.xlu0 %149
    %v151 = vmul.f32 %v150, 0.015625
    %v152 = vmul.f32 %v145, %v145
    %153 = vadd.xlane.f32.xlu0 %v152
    %v154 = vpop.xlane.xlu0 %153
    %v155 = vmul.f32 %v154, 0.015625
    %v156 = vmul.f32 %v151, %v151
    %v157 = vsub.f32 %v155, %v156
    %v158 = vmax.f32 %v157, 0.0
    %v159 = vadd.f32 %v158, 1e-05
    %v160 = vrsqrt.pop %v159
    %v161 = vmul.f32 %v160, %v159
    %v162 = vmul.f32 %v161, %v160
    %v163 = vmul.f32 0.5, %v162
    %v164 = vsub.f32 1.5, %v163
    %v165 = vmul.f32 %v160, %v164
    %vm166 = vweird.f32 %v159
    %vm167 = vweird.f32 %v160
    %vm168 = vmor %vm166, %vm167
    %v169 = vsel %vm168, %v160, %v165
    %v170 = vsub.f32 %v145, %v151
    %v171 = vmul.f32 %v170, %v169
    %v173 = vperm.slane %v147, 0
    %v175 = vmul.f32 %v171, %v173
    %v177 = vperm.slane %v148, 0
    %v179 = vadd.f32 %v175, %v177
    %v180 = vmax.f32 %v179, 0.0
    %v181 = vld [vmem:[#allocation7] sm:$0xff]
    %v182 = vld [vmem:[#allocation7 + $0x8] sm:$0xff]
    %v183 = vld [vmem:[#allocation7 + $0x10] sm:$0xff]
    %v184 = vld [vmem:[#allocation7 + $0x18] sm:$0xff]
    %v185 = vld [vmem:[#allocation7 + $0x20] sm:$0xff]
    %v186 = vld [vmem:[#allocation7 + $0x28] sm:$0xff]
    %v187 = vld [vmem:[#allocation7 + $0x30] sm:$0xff]
    %v188 = vld [vmem:[#allocation7 + $0x38] sm:$0xff]
    %v189 = vld [vmem:[#allocation7 + $0x40] sm:$0xff]
    %v190 = vld [vmem:[#allocation7 + $0x48] sm:$0xff]
    %v191 = vld [vmem:[#allocation7 + $0x50] sm:$0xff]
    %v192 = vld [vmem:[#allocation7 + $0x58] sm:$0xff]
    %v193 = vld [vmem:[#allocation7 + $0x60] sm:$0xff]
    %v194 = vld [vmem:[#allocation7 + $0x68] sm:$0xff]
    %v195 = vld [vmem:[#allocation7 + $0x70] sm:$0xff]
    %v196 = vld [vmem:[#allocation7 + $0x78] sm:$0xff]
    %v197 = vld [vmem:[%s6] sm:$0x1]
    %v199 = vperm.slane %v197, 0
    %201 = vmatpush.msra.mxu0 %v196
    %202 = vmatpush.msra.mxu0 %v195
    %203 = vmatpush.msra.mxu0 %v194
    %204 = vmatpush.msra.mxu0 %v193
    %205 = vmatpush.msra.mxu0 %v192
    %206 = vmatpush.msra.mxu0 %v191
    %207 = vmatpush.msra.mxu0 %v190
    %208 = vmatpush.msra.mxu0 %v189
    %209 = vmatpush.msra.mxu0 %v188
    %210 = vmatpush.msra.mxu0 %v187
    %211 = vmatpush.msra.mxu0 %v186
    %212 = vmatpush.msra.mxu0 %v185
    %213 = vmatpush.msra.mxu0 %v184
    %214 = vmatpush.msra.mxu0 %v183
    %215 = vmatpush.msra.mxu0 %v182
    %216 = vmatpush.msra.mxu0 %v181
    %217 = vmatmul.f32.gmra.mxu0 %v180
    %v218 = vpop.f32.mrf.mxu0
    %v219 = vadd.f32 %v199, %v218
    %220 = vdwg.mxu0
    %v221 = vld [vmem:[%s7] sm:$0x1]
    %v222 = vld [vmem:[%s8] sm:$0x1]
    %223 = vadd.xlane.f32.xlu0 %v219
    %v224 = vpop.xlane.xlu0 %223
    %v225 = vmul.f32 %v224, 0.015625
    %v226 = vmul.f32 %v219, %v219
    %227 = vadd.xlane.f32.xlu0 %v226
    %v228 = vpop.xlane.xlu0 %227
    %v229 = vmul.f32 %v228, 0.015625
    %v230 = vmul.f32 %v225, %v225
    %v231 = vsub.f32 %v229, %v230
    %v232 = vmax.f32 %v231, 0.0
    %v233 = vadd.f32 %v232, 1e-05
    %v234 = vrsqrt.pop %v233
    %v235 = vmul.f32 %v234, %v233
    %v236 = vmul.f32 %v235, %v234
    %v237 = vmul.f32 0.5, %v236
    %v238 = vsub.f32 1.5, %v237
    %v239 = vmul.f32 %v234, %v238
    %vm240 = vweird.f32 %v233
    %vm241 = vweird.f32 %v234
    %vm242 = vmor %vm240, %vm241
    %v243 = vsel %vm242, %v234, %v239
    %v244 = vsub.f32 %v219, %v225
    %v245 = vmul.f32 %v244, %v243
    %v247 = vperm.slane %v221, 0
    %v249 = vmul.f32 %v245, %v247
    %v251 = vperm.slane %v222, 0
    %v253 = vadd.f32 %v249, %v251
    %v254 = vmax.f32 %v253, 0.0
    %v255 = vld [vmem:[#allocation8] sm:$0xff]
    %v256 = vld [vmem:[#allocation8 + $0x8] sm:$0xff]
    %v257 = vld [vmem:[#allocation8 + $0x10] sm:$0xff]
    %v258 = vld [vmem:[#allocation8 + $0x18] sm:$0xff]
    %v259 = vld [vmem:[#allocation8 + $0x20] sm:$0xff]
    %v260 = vld [vmem:[#allocation8 + $0x28] sm:$0xff]
    %v261 = vld [vmem:[#allocation8 + $0x30] sm:$0xff]
    %v262 = vld [vmem:[#allocation8 + $0x38] sm:$0xff]
    %v263 = vld [vmem:[#allocation8 + $0x40] sm:$0xff]
    %v264 = vld [vmem:[#allocation8 + $0x48] sm:$0xff]
    %v265 = vld [vmem:[#allocation8 + $0x50] sm:$0xff]
    %v266 = vld [vmem:[#allocation8 + $0x58] sm:$0xff]
    %v267 = vld [vmem:[#allocation8 + $0x60] sm:$0xff]
    %v268 = vld [vmem:[#allocation8 + $0x68] sm:$0xff]
    %v269 = vld [vmem:[#allocation8 + $0x70] sm:$0xff]
    %v270 = vld [vmem:[#allocation8 + $0x78] sm:$0xff]
    %v271 = vld [vmem:[%s10] sm:$0x1]
    %v273 = vperm.slane %v271, 0
    %275 = vmatpush.msra.mxu0 %v270
    %276 = vmatpush.msra.mxu0 %v269
    %277 = vmatpush.msra.mxu0 %v268
    %278 = vmatpush.msra.mxu0 %v267
    %279 = vmatpush.msra.mxu0 %v266
    %280 = vmatpush.msra.mxu0 %v265
    %281 = vmatpush.msra.mxu0 %v264
    %282 = vmatpush.msra.mxu0 %v263
    %283 = vmatpush.msra.mxu0 %v262
    %284 = vmatpush.msra.mxu0 %v261
    %285 = vmatpush.msra.mxu0 %v260
    %286 = vmatpush.msra.mxu0 %v259
    %287 = vmatpush.msra.mxu0 %v258
    %288 = vmatpush.msra.mxu0 %v257
    %289 = vmatpush.msra.mxu0 %v256
    %290 = vmatpush.msra.mxu0 %v255
    %291 = vmatmul.f32.gmra.mxu0 %v254
    %v292 = vpop.f32.mrf.mxu0
    %v293 = vadd.f32 %v273, %v292
    %294 = vdwg.mxu0
    %v295 = vld [vmem:[%s11] sm:$0x1]
    %v296 = vld [vmem:[%s12] sm:$0x1]
    %297 = vadd.xlane.f32.xlu0 %v293
    %v298 = vpop.xlane.xlu0 %297
    %v299 = vmul.f32 %v298, 0.03125
    %v300 = vmul.f32 %v293, %v293
    %301 = vadd.xlane.f32.xlu0 %v300
    %v302 = vpop.xlane.xlu0 %301
    %v303 = vmul.f32 %v302, 0.03125
    %v304 = vmul.f32 %v299, %v299
    %v305 = vsub.f32 %v303, %v304
    %v306 = vmax.f32 %v305, 0.0
    %v307 = vadd.f32 %v306, 1e-05
    %v308 = vrsqrt.pop %v307
    %v309 = vmul.f32 %v308, %v307
    %v310 = vmul.f32 %v309, %v308
    %v311 = vmul.f32 0.5, %v310
    %v312 = vsub.f32 1.5, %v311
    %v313 = vmul.f32 %v308, %v312
    %vm314 = vweird.f32 %v307
    %vm315 = vweird.f32 %v308
    %vm316 = vmor %vm314, %vm315
    %v317 = vsel %vm316, %v308, %v313
    %v318 = vsub.f32 %v293, %v299
    %v319 = vmul.f32 %v318, %v317
    %v321 = vperm.slane %v295, 0
    %v323 = vmul.f32 %v319, %v321
    %v325 = vperm.slane %v296, 0
    %v327 = vadd.f32 %v323, %v325
    %328 = vst [vmem:[#allocation10] sm:$0xff] %v327
    // Predicated region
    $region70: #{_projection_impl.1} parent=1 // pred_check
      _
    $region71: #{_projection_impl.1} parent=1 // pred_check_branch
      %330 = sbr.rel (0) target = $region73
    $region72: #{_projection_impl.1} parent=1 // pred_region
      %332 = vsyncadd [#allocation4], 0
      %s334 = sshll.u32 [#allocation10], 4
      %s335 = int_to_ptr.vmem [resolvable:$true] %s334
      %s336 = sshll.u32 %s13, 4
      %s337 = int_to_ptr.hbm [resolvable:$true] %s336
      %339 = dma.vmem_to_hbm [thread:$0]  %s335, 128, %s337, [#allocation4]
    $region73: #{_projection_impl.1} parent=1 // pred_fallthru
      _
    // Predicated region
    $region74: #{_projection_impl.1} parent=1 // pred_check
      _
    $region75: #{_projection_impl.1} parent=1 // pred_check_branch
      %341 = sbr.rel (0) target = $region77
    $region76: #{_projection_impl.1} parent=1 // pred_region
      %343 = dma.done [#allocation4], 128
    $region77: #{_projection_impl.1} parent=1 // pred_fallthru
      _
    %344 = vsyncpa [#allocation3], 1
    %345 = vsyncpa [#allocation6], 1
    %346 = vsyncpa [#allocation9], 1
    %347 = vsyncpa [#allocation4], 1

</llo_original>
